<compile_context>
chip_gen: v5e
topology: v5e:2x2
jax: 0.10.0
libtpu: 0.0.40
codegen_flags: <defaults>
</compile_context>

<pallas_src>
import functools

import jax
import jax.numpy as jnp
from jax.experimental import pallas as pl
from jax.experimental.pallas import tpu as pltpu

EPS_ENT = 1e-10
LN_EPS = 1e-5
NEG_INF = -1e30


def _round_up(v, m):
    return (v + m - 1) // m * m


def _pick_tile(total, candidates):
    for c in candidates:
        if total % c == 0:
            return c
    return total


def _layernorm(z, w, b):
    mu = jnp.mean(z, axis=-1, keepdims=True)
    c = z - mu
    var = jnp.mean(c * c, axis=-1, keepdims=True)
    return c * jax.lax.rsqrt(var + LN_EPS) * w + b


def _layer_kernel(len_ref,                       # SMEM (1,) int32: valid kv rows
                  x_ref, kv_ref,
                  wq_ref, bq_ref, wk_ref, bk_ref, wv_ref, bv_ref,
                  wo_ref, bo_ref, ln1w_ref, ln1b_ref,
                  wf1_ref, bf1_ref, wf2_ref, bf2_ref,
                  ln2w_ref, ln2b_ref,
                  out_ref, ent_ref,
                  x2_scr, acc_scr,
                  *, num_heads):
    f32 = jnp.float32
    bf16 = jnp.bfloat16
    f_idx = pl.program_id(1)
    nf = pl.num_programs(1)

    TQ, E = x_ref.shape
    H = num_heads
    D = E // H

    # ---- attention + norm1 (+ entropy): once per query tile, at f == 0 ----
    @pl.when(f_idx == 0)
    def _attention():
        x = x_ref[...].astype(f32)                      # (TQ, E) f32
        xb = x.astype(bf16)
        kv = kv_ref[...]                                # (Lmax, E) bf16
        Lmax = kv.shape[0]

        # Merged 2-D projections; 1/sqrt(D) is pre-folded into wq/bq.
        # TODO(synk): when the query grid has >1 tile, hoist the K/V
        # projections into a prologue (they are recomputed per query tile).
        q = jnp.dot(xb, wq_ref[...], preferred_element_type=f32) + bq_ref[...]
        k = jnp.dot(kv, wk_ref[...], preferred_element_type=f32) + bk_ref[...]
        v = jnp.dot(kv, wv_ref[...], preferred_element_type=f32) + bv_ref[...]

        # Split heads only for the batched score / PV contractions.
        qh = jnp.transpose(q.reshape(TQ, H, D).astype(bf16), (1, 0, 2))
        kh = jnp.transpose(k.reshape(Lmax, H, D).astype(bf16), (1, 0, 2))
        vh = jnp.transpose(v.reshape(Lmax, H, D).astype(bf16), (1, 0, 2))

        s = jnp.einsum('hqd,hkd->hqk', qh, kh,
                       preferred_element_type=f32)       # (H, TQ, Lmax)

        # Mask padded key rows (valid length from SMEM scalar prefetch;
        # wrapper guarantees kv_len >= S >= 1).
        kv_len = len_ref[0]
        col = jax.lax.broadcasted_iota(jnp.int32, (1, 1, Lmax), 2)
        s = s + jnp.where(col < kv_len, 0.0, NEG_INF).astype(f32)
        # TODO(synk): for long memories, block over keys with an online
        # (flash-style) softmax instead of materializing (H, TQ, Lmax).

        m = jnp.max(s, axis=-1, keepdims=True)
        p = jnp.exp(s - m)
        denom = jnp.sum(p, axis=-1, keepdims=True)
        p = p * pl.reciprocal(denom, approx=False)       # exact; feeds entropy

        ctx = jnp.einsum('hqk,hkd->hqd', p.astype(bf16), vh,
                         preferred_element_type=f32)     # (H, TQ, D)
        ctx2d = jnp.transpose(ctx, (1, 0, 2)).reshape(TQ, E)
        attn_out = jnp.dot(ctx2d.astype(bf16), wo_ref[...],
                           preferred_element_type=f32) + bo_ref[...]

        x2_scr[...] = _layernorm(x + attn_out, ln1w_ref[...], ln1b_ref[...])
        acc_scr[...] = jnp.zeros_like(acc_scr)

        # Head-averaged probs -> per-query entropy, lane-dense (1, >=128).
        # Padded key columns have p == 0 exactly, so they contribute nothing.
        aw = jnp.sum(p, axis=0) * (1.0 / H)              # (TQ, Lmax)
        ent = -jnp.sum(aw * jnp.log(aw + EPS_ENT), axis=-1)   # (TQ,)
        ent_row = ent[None, :]
        lane_pad = ent_ref.shape[1] - TQ
        if lane_pad:
            ent_row = jnp.concatenate(
                [ent_row, jnp.zeros((1, lane_pad), f32)], axis=1)
        ent_ref[...] = ent_row

    # ---- FFN: one (E, TF) / (TF, E) weight tile per f step, f32 accumulate --
    x2 = x2_scr[...]
    h1 = jnp.dot(x2.astype(bf16), wf1_ref[...],
                 preferred_element_type=f32) + bf1_ref[...]
    h1 = jnp.maximum(h1, 0.0)
    acc_scr[...] += jnp.dot(h1.astype(bf16), wf2_ref[...],
                            preferred_element_type=f32)

    @pl.when(f_idx == nf - 1)
    def _finalize():
        h2 = acc_scr[...] + bf2_ref[...]
        out = _layernorm(x2_scr[...] + h2, ln2w_ref[...], ln2b_ref[...])
        out_ref[...] = out.astype(out_ref.dtype)


@functools.partial(jax.jit, static_argnames=("num_heads",))
def _layer_forward(x2d, kv_pad, kv_len, params, *, num_heads):
    S, E = x2d.shape
    Lmax, _ = kv_pad.shape
    F = 4 * E

    # TQ=256 fills the 2x256x256 MXU on v6e/v7x (neutral on v5e, which has
    # VMEM headroom); odd sequence lengths fall back to a single full-S tile.
    TQ = _pick_tile(S, (256, 128))
    TF = _pick_tile(F, (2048, 1024, 512))
    grid = (S // TQ, F // TF)
    # TODO(synk): when grid[0] == 1 (small S), v7x's second TensorCore idles;
    # splitting heads or FFN tiles onto a parallel axis would need a second
    # accumulator strategy.

    if TQ % 128 == 0:
        S_ent, ent_blk = S, TQ
    else:                          # single query tile: pad ent to 128 lanes
        S_ent = _round_up(S, 128)
        ent_blk = S_ent

    resident = dict(pipeline_mode=pl.Buffered(1))   # single-buffer constants

    def c2(i, f, n):
        return (0, 0)

    in_specs = [
        pl.BlockSpec((TQ, E), lambda i, f, n: (i, 0)),              # x
        pl.BlockSpec((Lmax, E), c2, **resident),                    # kv (bf16)
        pl.BlockSpec((E, E), c2, **resident),                       # wq
        pl.BlockSpec((1, E), c2, **resident),                       # bq
        pl.BlockSpec((E, E), c2, **resident),                       # wk
        pl.BlockSpec((1, E), c2, **resident),                       # bk
        pl.BlockSpec((E, E), c2, **resident),                       # wv
        pl.BlockSpec((1, E), c2, **resident),                       # bv
        pl.BlockSpec((E, E), c2, **resident),                       # wo
        pl.BlockSpec((1, E), c2, **resident),                       # bo
        pl.BlockSpec((1, E), c2, **resident),                       # ln1_w
        pl.BlockSpec((1, E), c2, **resident),                       # ln1_b
        pl.BlockSpec((E, TF), lambda i, f, n: (0, f)),              # wf1 tile
        pl.BlockSpec((1, TF), lambda i, f, n: (0, f)),              # bf1 tile
        pl.BlockSpec((TF, E), lambda i, f, n: (f, 0)),              # wf2 tile
        pl.BlockSpec((1, E), c2, **resident),                       # bf2
        pl.BlockSpec((1, E), c2, **resident),                       # ln2_w
        pl.BlockSpec((1, E), c2, **resident),                       # ln2_b
    ]
    out_specs = (
        pl.BlockSpec((TQ, E), lambda i, f, n: (i, 0)),              # out
        pl.BlockSpec((1, ent_blk), lambda i, f, n: (0, i)),         # entropy
    )

    grid_spec = pltpu.PrefetchScalarGridSpec(
        num_scalar_prefetch=1,
        grid=grid,
        in_specs=in_specs,
        out_specs=out_specs,
        scratch_shapes=[
            pltpu.VMEM((TQ, E), jnp.float32),   # x2 (post-norm1)
            pltpu.VMEM((TQ, E), jnp.float32),   # FFN accumulator
        ],
    )

    out2d, ent_row = pl.pallas_call(
        functools.partial(_layer_kernel, num_heads=num_heads),
        out_shape=(
            jax.ShapeDtypeStruct((S, E), jnp.float32),
            jax.ShapeDtypeStruct((1, S_ent), jnp.float32),
        ),
        grid_spec=grid_spec,
        compiler_params=pltpu.CompilerParams(
            dimension_semantics=("parallel", "arbitrary"),
            vmem_limit_bytes=48 * 1024 * 1024),
    )(kv_len, x2d, kv_pad,
      params["wq"], params["bq"], params["wk"], params["bk"],
      params["wv"], params["bv"], params["wo"], params["bo"],
      params["ln1_w"], params["ln1_b"],
      params["wf1"], params["bf1"], params["wf2"], params["bf2"],
      params["ln2_w"], params["ln2_b"])
    return out2d, ent_row[0, :S]


def init_params(embed_dim, num_heads, key):
    E = embed_dim
    H = num_heads
    D = E // H
    F = 4 * E
    ks = jax.random.split(key, 6)
    sc = 0.1
    scale = 1.0 / (D ** 0.5)        # softmax scale folded into wq / bq
    f32, bf16 = jnp.float32, jnp.bfloat16
    return {
        # merged-head projections: q = x @ wq + bq; heads are contiguous
        # D-wide column blocks.  Any nonzero bq must also be pre-scaled.
        "wq": (sc * scale * jax.random.normal(ks[0], (E, E), f32)).astype(bf16),
        "wk": (sc * jax.random.normal(ks[1], (E, E), f32)).astype(bf16),
        "wv": (sc * jax.random.normal(ks[2], (E, E), f32)).astype(bf16),
        "bq": jnp.zeros((1, E), f32),
        "bk": jnp.zeros((1, E), f32),
        "bv": jnp.zeros((1, E), f32),
        # merged output projection: attn_out = concat_h(ctx_h) @ wo + bo
        "wo": (sc * jax.random.normal(ks[3], (E, E), f32)).astype(bf16),
        "bo": jnp.zeros((1, E), f32),
        "ln1_w": jnp.ones((1, E), f32),
        "ln1_b": jnp.zeros((1, E), f32),
        "wf1": (sc * jax.random.normal(ks[4], (E, F), f32)).astype(bf16),
        "bf1": jnp.zeros((1, F), f32),
        "wf2": (sc * jax.random.normal(ks[5], (F, E), f32)).astype(bf16),
        "bf2": jnp.zeros((1, E), f32),
        "ln2_w": jnp.ones((1, E), f32),
        "ln2_b": jnp.zeros((1, E), f32),
    }


def memory_transformer_layer(x, mem_x, mem_ent, params, num_heads, mem_size):
    """Mirrors MemoryTransformerLayer.forward. x: (1, S, E)."""
    B, S, E = x.shape
    assert B == 1, "torch code's mem concat implies batch size 1"
    x2d = x[0]

    # Fixed kv length (mem_size + S rounded to a sublane multiple) so the
    # Mosaic kernel compiles once; padded key rows are masked in-kernel.
    L_max = _round_up(mem_size + S, 8)
    if mem_x is None:
        kv_valid = x2d
    else:
        kv_valid = jnp.concatenate([mem_x, x2d], axis=0)
    kv_len = kv_valid.shape[0]
    assert 1 <= kv_len <= L_max
    pad = L_max - kv_len
    if pad:
        kv_pad = jnp.concatenate(
            [kv_valid, jnp.zeros((pad, E), kv_valid.dtype)], axis=0)
    else:
        kv_pad = kv_valid
    kv_pad = kv_pad.astype(jnp.bfloat16)   # only consumed as a bf16 matmul operand

    out2d, ent = _layer_forward(
        x2d, kv_pad, jnp.array([kv_len], jnp.int32), params,
        num_heads=num_heads)

    out = out2d[None]                       # (1, S, E)
    ent = jax.lax.stop_gradient(ent)        # matches torch .detach()
    x_det = jax.lax.stop_gradient(x2d)      # x.detach()[0]
    if mem_x is None:
        mem_x_new = x_det
        mem_ent_new = ent
    else:
        mem_x_new = jnp.concatenate([mem_x, x_det], axis=0)
        mem_ent_new = jnp.concatenate([mem_ent, ent], axis=0)

    # Device-side bookkeeping: no float() host syncs; ratio stays a jnp scalar.
    total_ent = jnp.sum(mem_ent_new) + EPS_ENT
    if mem_x_new.shape[0] > mem_size:
        # TODO(synk): entropy top-k eviction stays in plain JAX (no Pallas sort/top-k).
        vals, idx = jax.lax.top_k(mem_ent_new, mem_size)
        ratio = jnp.sum(vals) / total_ent
        mem_x_new = mem_x_new[idx]
        mem_ent_new = vals
    else:
        ratio = jnp.float32(1.0)
    return out, mem_x_new, mem_ent_new, ratio


if __name__ == "__main__":
    B, S, E = 1, 8, 32
    num_heads = 2
    mem_size = 20
    M = 16  # pre-existing memory rows -> M + S = 24 > mem_size exercises top-k

    key = jax.random.PRNGKey(0)
    kx, kmem, kent, kp = jax.random.split(key, 4)
    x = jax.random.normal(kx, (B, S, E), jnp.float32)
    mem_x = jax.random.normal(kmem, (M, E), jnp.float32)
    mem_ent = jnp.abs(jax.random.normal(kent, (M,), jnp.float32))

    params = init_params(E, num_heads, kp)

    # memory path (k = cat([mem_x, x]) with top-k eviction)
    out, mem_x_new, mem_ent_new, ratio = memory_transformer_layer(
        x, mem_x, mem_ent, params, num_heads, mem_size)
    jax.block_until_ready((out, mem_x_new, mem_ent_new, ratio))

    # no-memory path (k = v = x); reuses the same compiled kernel (fixed L_max)
    out0, mem_x0, mem_ent0, ratio0 = memory_transformer_layer(
        x, None, None, params, num_heads, mem_size)
    jax.block_until_ready((out0, mem_x0, mem_ent0, ratio0))

    assert out.shape == (B, S, E)
    assert mem_x_new.shape == (mem_size, E)
    assert mem_ent_new.shape == (mem_size,)
    assert mem_x0.shape == (S, E) and mem_ent0.shape == (S,)
    assert bool(jnp.isfinite(out).all()) and bool(jnp.isfinite(out0).all())
    assert bool(jnp.isfinite(mem_ent_new).all())
    assert 0.0 < float(ratio) <= 1.0 and float(ratio0) == 1.0
    print("KERNEL_OK")
</pallas_src>

<mosaic_0001>
module attributes {stable_mosaic.version = 11 : i64} {
  func.func @_layer_kernel(%arg0: i32, %arg1: i32, %arg2: memref<1xi32, #tpu.memory_space<smem>>, %arg3: memref<8x32xf32, #tpu.memory_space<vmem>>, %arg4: memref<32x32xbf16, #tpu.memory_space<vmem>>, %arg5: memref<32x32xbf16, #tpu.memory_space<vmem>>, %arg6: memref<1x32xf32, #tpu.memory_space<vmem>>, %arg7: memref<32x32xbf16, #tpu.memory_space<vmem>>, %arg8: memref<1x32xf32, #tpu.memory_space<vmem>>, %arg9: memref<32x32xbf16, #tpu.memory_space<vmem>>, %arg10: memref<1x32xf32, #tpu.memory_space<vmem>>, %arg11: memref<32x32xbf16, #tpu.memory_space<vmem>>, %arg12: memref<1x32xf32, #tpu.memory_space<vmem>>, %arg13: memref<1x32xf32, #tpu.memory_space<vmem>>, %arg14: memref<1x32xf32, #tpu.memory_space<vmem>>, %arg15: memref<32x128xbf16, #tpu.memory_space<vmem>>, %arg16: memref<1x128xf32, #tpu.memory_space<vmem>>, %arg17: memref<128x32xbf16, #tpu.memory_space<vmem>>, %arg18: memref<1x32xf32, #tpu.memory_space<vmem>>, %arg19: memref<1x32xf32, #tpu.memory_space<vmem>>, %arg20: memref<1x32xf32, #tpu.memory_space<vmem>>, %arg21: memref<8x32xf32, #tpu.memory_space<vmem>>, %arg22: memref<1x128xf32, #tpu.memory_space<vmem>>, %arg23: memref<8x32xf32, #tpu.memory_space<vmem>>, %arg24: memref<8x32xf32, #tpu.memory_space<vmem>>) attributes {dimension_semantics = [#tpu.dimension_semantics<parallel>, #tpu.dimension_semantics<arbitrary>], iteration_bounds = array<i64: 1, 1>, scalar_prefetch = 1 : i64, scratch_operands = 2 : i64, tpu.core_type = #tpu.core_type<tc>, window_params = [{transform_indices = @transform_0, window_bounds = array<i64: 8, 32>}, {pipeline_mode = #tpu.pipeline_mode<synchronous>, transform_indices = @transform_1, window_bounds = array<i64: 32, 32>}, {pipeline_mode = #tpu.pipeline_mode<synchronous>, transform_indices = @transform_2, window_bounds = array<i64: 32, 32>}, {pipeline_mode = #tpu.pipeline_mode<synchronous>, transform_indices = @transform_3, window_bounds = array<i64: 1, 32>}, {pipeline_mode = #tpu.pipeline_mode<synchronous>, transform_indices = @transform_4, window_bounds = array<i64: 32, 32>}, {pipeline_mode = #tpu.pipeline_mode<synchronous>, transform_indices = @transform_5, window_bounds = array<i64: 1, 32>}, {pipeline_mode = #tpu.pipeline_mode<synchronous>, transform_indices = @transform_6, window_bounds = array<i64: 32, 32>}, {pipeline_mode = #tpu.pipeline_mode<synchronous>, transform_indices = @transform_7, window_bounds = array<i64: 1, 32>}, {pipeline_mode = #tpu.pipeline_mode<synchronous>, transform_indices = @transform_8, window_bounds = array<i64: 32, 32>}, {pipeline_mode = #tpu.pipeline_mode<synchronous>, transform_indices = @transform_9, window_bounds = array<i64: 1, 32>}, {pipeline_mode = #tpu.pipeline_mode<synchronous>, transform_indices = @transform_10, window_bounds = array<i64: 1, 32>}, {pipeline_mode = #tpu.pipeline_mode<synchronous>, transform_indices = @transform_11, window_bounds = array<i64: 1, 32>}, {transform_indices = @transform_12, window_bounds = array<i64: 32, 128>}, {transform_indices = @transform_13, window_bounds = array<i64: 1, 128>}, {transform_indices = @transform_14, window_bounds = array<i64: 128, 32>}, {pipeline_mode = #tpu.pipeline_mode<synchronous>, transform_indices = @transform_15, window_bounds = array<i64: 1, 32>}, {pipeline_mode = #tpu.pipeline_mode<synchronous>, transform_indices = @transform_16, window_bounds = array<i64: 1, 32>}, {pipeline_mode = #tpu.pipeline_mode<synchronous>, transform_indices = @transform_17, window_bounds = array<i64: 1, 32>}, {transform_indices = @transform_18, window_bounds = array<i64: 8, 32>}, {transform_indices = @transform_19, window_bounds = array<i64: 1, 128>}]} {
    %c0_i32 = arith.constant 0 : i32
    %0 = arith.cmpi eq, %arg1, %c0_i32 : i32
    %1 = arith.extui %0 : i1 to i32
    %c0_i32_0 = arith.constant 0 : i32
    %2 = arith.cmpi ne, %1, %c0_i32_0 : i32
    scf.if %2 {
      %c0_16 = arith.constant 0 : index
      %c0_17 = arith.constant 0 : index
      %21 = vector.load %arg3[%c0_16, %c0_17] : memref<8x32xf32, #tpu.memory_space<vmem>>, vector<8x32xf32>
      %22 = arith.truncf %21 : vector<8x32xf32> to vector<8x32xbf16>
      %c0_18 = arith.constant 0 : index
      %c0_19 = arith.constant 0 : index
      %23 = vector.load %arg4[%c0_18, %c0_19] : memref<32x32xbf16, #tpu.memory_space<vmem>>, vector<32x32xbf16>
      %c0_20 = arith.constant 0 : index
      %c0_21 = arith.constant 0 : index
      %24 = vector.load %arg5[%c0_20, %c0_21] : memref<32x32xbf16, #tpu.memory_space<vmem>>, vector<32x32xbf16>
      %cst_22 = arith.constant dense<0.000000e+00> : vector<8x32xf32>
      %25 = tpu.matmul %22, %24, %cst_22 {dimension_numbers = #tpu.dot_dimension_numbers<[1], [0], [0], [1], [0, 0, 1, 1], [], []>} : vector<8x32xbf16>, vector<32x32xbf16>, vector<8x32xf32> -> vector<8x32xf32>
      %c0_23 = arith.constant 0 : index
      %c0_24 = arith.constant 0 : index
      %26 = vector.load %arg6[%c0_23, %c0_24] : memref<1x32xf32, #tpu.memory_space<vmem>>, vector<1x32xf32>
      %27 = vector.broadcast %26 : vector<1x32xf32> to vector<8x32xf32>
      %28 = arith.addf %25, %27 : vector<8x32xf32>
      %c0_25 = arith.constant 0 : index
      %c0_26 = arith.constant 0 : index
      %29 = vector.load %arg7[%c0_25, %c0_26] : memref<32x32xbf16, #tpu.memory_space<vmem>>, vector<32x32xbf16>
      %cst_27 = arith.constant dense<0.000000e+00> : vector<32x32xf32>
      %30 = tpu.matmul %23, %29, %cst_27 {dimension_numbers = #tpu.dot_dimension_numbers<[1], [0], [0], [1], [0, 0, 1, 1], [], []>} : vector<32x32xbf16>, vector<32x32xbf16>, vector<32x32xf32> -> vector<32x32xf32>
      %c0_28 = arith.constant 0 : index
      %c0_29 = arith.constant 0 : index
      %31 = vector.load %arg8[%c0_28, %c0_29] : memref<1x32xf32, #tpu.memory_space<vmem>>, vector<1x32xf32>
      %32 = vector.broadcast %31 : vector<1x32xf32> to vector<32x32xf32>
      %33 = arith.addf %30, %32 : vector<32x32xf32>
      %c0_30 = arith.constant 0 : index
      %c0_31 = arith.constant 0 : index
      %34 = vector.load %arg9[%c0_30, %c0_31] : memref<32x32xbf16, #tpu.memory_space<vmem>>, vector<32x32xbf16>
      %cst_32 = arith.constant dense<0.000000e+00> : vector<32x32xf32>
      %35 = tpu.matmul %23, %34, %cst_32 {dimension_numbers = #tpu.dot_dimension_numbers<[1], [0], [0], [1], [0, 0, 1, 1], [], []>} : vector<32x32xbf16>, vector<32x32xbf16>, vector<32x32xf32> -> vector<32x32xf32>
      %c0_33 = arith.constant 0 : index
      %c0_34 = arith.constant 0 : index
      %36 = vector.load %arg10[%c0_33, %c0_34] : memref<1x32xf32, #tpu.memory_space<vmem>>, vector<1x32xf32>
      %37 = vector.broadcast %36 : vector<1x32xf32> to vector<32x32xf32>
      %38 = arith.addf %35, %37 : vector<32x32xf32>
      %39 = vector.shape_cast %28 : vector<8x32xf32> to vector<8x2x16xf32>
      %40 = arith.truncf %39 : vector<8x2x16xf32> to vector<8x2x16xbf16>
      %41 = tpu.transpose %40, [1, 0, 2] : vector<8x2x16xbf16> -> vector<2x8x16xbf16>
      %42 = vector.shape_cast %33 : vector<32x32xf32> to vector<32x2x16xf32>
      %43 = arith.truncf %42 : vector<32x2x16xf32> to vector<32x2x16xbf16>
      %44 = tpu.transpose %43, [1, 0, 2] : vector<32x2x16xbf16> -> vector<2x32x16xbf16>
      %45 = vector.shape_cast %38 : vector<32x32xf32> to vector<32x2x16xf32>
      %46 = arith.truncf %45 : vector<32x2x16xf32> to vector<32x2x16xbf16>
      %47 = tpu.transpose %46, [1, 0, 2] : vector<32x2x16xbf16> -> vector<2x32x16xbf16>
      "tpu.trace_start"() <{level = 10 : i32, message = "hqd,hkd->hqk"}> : () -> ()
      %cst_35 = arith.constant dense<0.000000e+00> : vector<2x8x32xf32>
      %48 = tpu.matmul %41, %44, %cst_35 {dimension_numbers = #tpu.dot_dimension_numbers<[2], [2], [1], [1], [0, 0, 0, 1, 1, 1], [0], [0]>} : vector<2x8x16xbf16>, vector<2x32x16xbf16>, vector<2x8x32xf32> -> vector<2x8x32xf32>
      "tpu.trace_stop"() : () -> ()
      %c0_36 = arith.constant 0 : index
      %49 = memref.load %arg2[%c0_36] : memref<1xi32, #tpu.memory_space<smem>>
      %50 = tpu.iota {dimensions = array<i32: 2>} : vector<1x1x32xi32>
      %51 = vector.broadcast %49 : i32 to vector<1x1x32xi32>
      %52 = arith.cmpi slt, %50, %51 : vector<1x1x32xi32>
      %cst_37 = arith.constant 0.000000e+00 : f32
      %cst_38 = arith.constant -1.000000e+30 : f32
      %53 = vector.broadcast %cst_37 : f32 to vector<1x1x32xf32>
      %54 = vector.broadcast %cst_38 : f32 to vector<1x1x32xf32>
      %55 = arith.select %52, %53, %54 : vector<1x1x32xi1>, vector<1x1x32xf32>
      %56 = vector.broadcast %55 : vector<1x1x32xf32> to vector<2x8x32xf32>
      %57 = arith.addf %48, %56 : vector<2x8x32xf32>
      %cst_39 = arith.constant dense<0xFF800000> : vector<2x8xf32>
      %58 = vector.multi_reduction <maximumf>, %57, %cst_39 [2] : vector<2x8x32xf32> to vector<2x8xf32>
      %59 = vector.shape_cast %58 : vector<2x8xf32> to vector<2x8x1xf32>
      %60 = vector.broadcast %59 : vector<2x8x1xf32> to vector<2x8x32xf32>
      %61 = arith.subf %57, %60 : vector<2x8x32xf32>
      %62 = math.exp %61 : vector<2x8x32xf32>
      %cst_40 = arith.constant dense<0.000000e+00> : vector<2x8xf32>
      %63 = vector.multi_reduction <add>, %62, %cst_40 [2] : vector<2x8x32xf32> to vector<2x8xf32>
      %64 = vector.shape_cast %63 : vector<2x8xf32> to vector<2x8x1xf32>
      %65 = tpu.reciprocal %64 : vector<2x8x1xf32> -> vector<2x8x1xf32>
      %66 = vector.broadcast %65 : vector<2x8x1xf32> to vector<2x8x32xf32>
      %67 = arith.mulf %62, %66 : vector<2x8x32xf32>
      %68 = arith.truncf %67 : vector<2x8x32xf32> to vector<2x8x32xbf16>
      "tpu.trace_start"() <{level = 10 : i32, message = "hqk,hkd->hqd"}> : () -> ()
      %cst_41 = arith.constant dense<0.000000e+00> : vector<2x8x16xf32>
      %69 = tpu.matmul %68, %47, %cst_41 {dimension_numbers = #tpu.dot_dimension_numbers<[2], [1], [1], [2], [0, 0, 0, 1, 1, 2], [0], [0]>} : vector<2x8x32xbf16>, vector<2x32x16xbf16>, vector<2x8x16xf32> -> vector<2x8x16xf32>
      "tpu.trace_stop"() : () -> ()
      %70 = tpu.transpose %69, [1, 0, 2] : vector<2x8x16xf32> -> vector<8x2x16xf32>
      %71 = vector.shape_cast %70 : vector<8x2x16xf32> to vector<8x32xf32>
      %72 = arith.truncf %71 : vector<8x32xf32> to vector<8x32xbf16>
      %c0_42 = arith.constant 0 : index
      %c0_43 = arith.constant 0 : index
      %73 = vector.load %arg11[%c0_42, %c0_43] : memref<32x32xbf16, #tpu.memory_space<vmem>>, vector<32x32xbf16>
      %cst_44 = arith.constant dense<0.000000e+00> : vector<8x32xf32>
      %74 = tpu.matmul %72, %73, %cst_44 {dimension_numbers = #tpu.dot_dimension_numbers<[1], [0], [0], [1], [0, 0, 1, 1], [], []>} : vector<8x32xbf16>, vector<32x32xbf16>, vector<8x32xf32> -> vector<8x32xf32>
      %c0_45 = arith.constant 0 : index
      %c0_46 = arith.constant 0 : index
      %75 = vector.load %arg12[%c0_45, %c0_46] : memref<1x32xf32, #tpu.memory_space<vmem>>, vector<1x32xf32>
      %76 = vector.broadcast %75 : vector<1x32xf32> to vector<8x32xf32>
      %77 = arith.addf %74, %76 : vector<8x32xf32>
      %78 = arith.addf %21, %77 : vector<8x32xf32>
      %c0_47 = arith.constant 0 : index
      %c0_48 = arith.constant 0 : index
      %79 = vector.load %arg13[%c0_47, %c0_48] : memref<1x32xf32, #tpu.memory_space<vmem>>, vector<1x32xf32>
      %c0_49 = arith.constant 0 : index
      %c0_50 = arith.constant 0 : index
      %80 = vector.load %arg14[%c0_49, %c0_50] : memref<1x32xf32, #tpu.memory_space<vmem>>, vector<1x32xf32>
      %cst_51 = arith.constant dense<0.000000e+00> : vector<8xf32>
      %81 = vector.multi_reduction <add>, %78, %cst_51 [1] : vector<8x32xf32> to vector<8xf32>
      %82 = vector.shape_cast %81 : vector<8xf32> to vector<8x1xf32>
      %cst_52 = arith.constant 3.200000e+01 : f32
      %83 = vector.broadcast %cst_52 : f32 to vector<8x1xf32>
      %84 = arith.divf %82, %83 : vector<8x1xf32>
      %85 = vector.broadcast %84 : vector<8x1xf32> to vector<8x32xf32>
      %86 = arith.subf %78, %85 : vector<8x32xf32>
      %87 = arith.mulf %86, %86 : vector<8x32xf32>
      %cst_53 = arith.constant dense<0.000000e+00> : vector<8xf32>
      %88 = vector.multi_reduction <add>, %87, %cst_53 [1] : vector<8x32xf32> to vector<8xf32>
      %89 = vector.shape_cast %88 : vector<8xf32> to vector<8x1xf32>
      %cst_54 = arith.constant 3.200000e+01 : f32
      %90 = vector.broadcast %cst_54 : f32 to vector<8x1xf32>
      %91 = arith.divf %89, %90 : vector<8x1xf32>
      %cst_55 = arith.constant 9.99999974E-6 : f32
      %92 = vector.broadcast %cst_55 : f32 to vector<8x1xf32>
      %93 = arith.addf %91, %92 : vector<8x1xf32>
      %94 = math.rsqrt %93 : vector<8x1xf32>
      %95 = vector.broadcast %94 : vector<8x1xf32> to vector<8x32xf32>
      %96 = arith.mulf %86, %95 : vector<8x32xf32>
      %97 = vector.broadcast %79 : vector<1x32xf32> to vector<8x32xf32>
      %98 = arith.mulf %96, %97 : vector<8x32xf32>
      %99 = vector.broadcast %80 : vector<1x32xf32> to vector<8x32xf32>
      %100 = arith.addf %98, %99 : vector<8x32xf32>
      %c0_56 = arith.constant 0 : index
      %c0_57 = arith.constant 0 : index
      %101 = vector.load %arg23[%c0_56, %c0_57] : memref<8x32xf32, #tpu.memory_space<vmem>>, vector<8x32xf32>
      tpu.vector_store %arg23[%c0_56, %c0_57], %100 {strides = array<i32>} : memref<8x32xf32, #tpu.memory_space<vmem>>, vector<8x32xf32>,
      %cst_58 = arith.constant 0.000000e+00 : f32
      %102 = vector.broadcast %cst_58 : f32 to vector<8x32xf32>
      %c0_59 = arith.constant 0 : index
      %c0_60 = arith.constant 0 : index
      %103 = vector.load %arg24[%c0_59, %c0_60] : memref<8x32xf32, #tpu.memory_space<vmem>>, vector<8x32xf32>
      tpu.vector_store %arg24[%c0_59, %c0_60], %102 {strides = array<i32>} : memref<8x32xf32, #tpu.memory_space<vmem>>, vector<8x32xf32>,
      %cst_61 = arith.constant dense<0.000000e+00> : vector<8x32xf32>
      %104 = vector.multi_reduction <add>, %67, %cst_61 [0] : vector<2x8x32xf32> to vector<8x32xf32>
      %cst_62 = arith.constant 5.000000e-01 : f32
      %105 = vector.broadcast %cst_62 : f32 to vector<8x32xf32>
      %106 = arith.mulf %104, %105 : vector<8x32xf32>
      %cst_63 = arith.constant 1.000000e-10 : f32
      %107 = vector.broadcast %cst_63 : f32 to vector<8x32xf32>
      %108 = arith.addf %106, %107 : vector<8x32xf32>
      %109 = math.log %108 : vector<8x32xf32>
      %110 = arith.mulf %106, %109 : vector<8x32xf32>
      %cst_64 = arith.constant dense<0.000000e+00> : vector<8xf32>
      %111 = vector.multi_reduction <add>, %110, %cst_64 [1] : vector<8x32xf32> to vector<8xf32>
      %cst_65 = arith.constant 0.000000e+00 : f32
      %112 = vector.broadcast %cst_65 : f32 to vector<8xf32>
      %113 = arith.subf %112, %111 : vector<8xf32>
      %114 = vector.shape_cast %113 : vector<8xf32> to vector<1x8xf32>
      %cst_66 = arith.constant 0.000000e+00 : f32
      %115 = vector.broadcast %cst_66 : f32 to vector<1x120xf32>
      %116 = tpu.concatenate %114, %115 in 1 : vector<1x8xf32>, vector<1x120xf32> -> vector<1x128xf32>
      %c0_67 = arith.constant 0 : index
      %c0_68 = arith.constant 0 : index
      %117 = vector.load %arg22[%c0_67, %c0_68] : memref<1x128xf32, #tpu.memory_space<vmem>>, vector<1x128xf32>
      tpu.vector_store %arg22[%c0_67, %c0_68], %116 {strides = array<i32>} : memref<1x128xf32, #tpu.memory_space<vmem>>, vector<1x128xf32>,
    } else {
    }
    %c0 = arith.constant 0 : index
    %c0_1 = arith.constant 0 : index
    %3 = vector.load %arg23[%c0, %c0_1] : memref<8x32xf32, #tpu.memory_space<vmem>>, vector<8x32xf32>
    %4 = arith.truncf %3 : vector<8x32xf32> to vector<8x32xbf16>
    %c0_2 = arith.constant 0 : index
    %c0_3 = arith.constant 0 : index
    %5 = vector.load %arg15[%c0_2, %c0_3] : memref<32x128xbf16, #tpu.memory_space<vmem>>, vector<32x128xbf16>
    %cst = arith.constant dense<0.000000e+00> : vector<8x128xf32>
    %6 = tpu.matmul %4, %5, %cst {dimension_numbers = #tpu.dot_dimension_numbers<[1], [0], [0], [1], [0, 0, 1, 1], [], []>} : vector<8x32xbf16>, vector<32x128xbf16>, vector<8x128xf32> -> vector<8x128xf32>
    %c0_4 = arith.constant 0 : index
    %c0_5 = arith.constant 0 : index
    %7 = vector.load %arg16[%c0_4, %c0_5] : memref<1x128xf32, #tpu.memory_space<vmem>>, vector<1x128xf32>
    %8 = vector.broadcast %7 : vector<1x128xf32> to vector<8x128xf32>
    %9 = arith.addf %6, %8 : vector<8x128xf32>
    %cst_6 = arith.constant 0.000000e+00 : f32
    %10 = vector.broadcast %cst_6 : f32 to vector<8x128xf32>
    %11 = arith.maximumf %9, %10 : vector<8x128xf32>
    %c0_7 = arith.constant 0 : index
    %c0_8 = arith.constant 0 : index
    %12 = vector.load %arg24[%c0_7, %c0_8] : memref<8x32xf32, #tpu.memory_space<vmem>>, vector<8x32xf32>
    %13 = arith.truncf %11 : vector<8x128xf32> to vector<8x128xbf16>
    %c0_9 = arith.constant 0 : index
    %c0_10 = arith.constant 0 : index
    %14 = vector.load %arg17[%c0_9, %c0_10] : memref<128x32xbf16, #tpu.memory_space<vmem>>, vector<128x32xbf16>
    %cst_11 = arith.constant dense<0.000000e+00> : vector<8x32xf32>
    %15 = tpu.matmul %13, %14, %cst_11 {dimension_numbers = #tpu.dot_dimension_numbers<[1], [0], [0], [1], [0, 0, 1, 1], [], []>} : vector<8x128xbf16>, vector<128x32xbf16>, vector<8x32xf32> -> vector<8x32xf32>
    %16 = arith.addf %12, %15 : vector<8x32xf32>
    %c0_12 = arith.constant 0 : index
    %c0_13 = arith.constant 0 : index
    %17 = vector.load %arg24[%c0_12, %c0_13] : memref<8x32xf32, #tpu.memory_space<vmem>>, vector<8x32xf32>
    tpu.vector_store %arg24[%c0_12, %c0_13], %16 {strides = array<i32>} : memref<8x32xf32, #tpu.memory_space<vmem>>, vector<8x32xf32>,
    %c0_i32_14 = arith.constant 0 : i32
    %18 = arith.cmpi eq, %arg1, %c0_i32_14 : i32
    %19 = arith.extui %18 : i1 to i32
    %c0_i32_15 = arith.constant 0 : i32
    %20 = arith.cmpi ne, %19, %c0_i32_15 : i32
    scf.if %20 {
      %c0_16 = arith.constant 0 : index
      %c0_17 = arith.constant 0 : index
      %21 = vector.load %arg24[%c0_16, %c0_17] : memref<8x32xf32, #tpu.memory_space<vmem>>, vector<8x32xf32>
      %c0_18 = arith.constant 0 : index
      %c0_19 = arith.constant 0 : index
      %22 = vector.load %arg18[%c0_18, %c0_19] : memref<1x32xf32, #tpu.memory_space<vmem>>, vector<1x32xf32>
      %23 = vector.broadcast %22 : vector<1x32xf32> to vector<8x32xf32>
      %24 = arith.addf %21, %23 : vector<8x32xf32>
      %c0_20 = arith.constant 0 : index
      %c0_21 = arith.constant 0 : index
      %25 = vector.load %arg23[%c0_20, %c0_21] : memref<8x32xf32, #tpu.memory_space<vmem>>, vector<8x32xf32>
      %26 = arith.addf %25, %24 : vector<8x32xf32>
      %c0_22 = arith.constant 0 : index
      %c0_23 = arith.constant 0 : index
      %27 = vector.load %arg19[%c0_22, %c0_23] : memref<1x32xf32, #tpu.memory_space<vmem>>, vector<1x32xf32>
      %c0_24 = arith.constant 0 : index
      %c0_25 = arith.constant 0 : index
      %28 = vector.load %arg20[%c0_24, %c0_25] : memref<1x32xf32, #tpu.memory_space<vmem>>, vector<1x32xf32>
      %cst_26 = arith.constant dense<0.000000e+00> : vector<8xf32>
      %29 = vector.multi_reduction <add>, %26, %cst_26 [1] : vector<8x32xf32> to vector<8xf32>
      %30 = vector.shape_cast %29 : vector<8xf32> to vector<8x1xf32>
      %cst_27 = arith.constant 3.200000e+01 : f32
      %31 = vector.broadcast %cst_27 : f32 to vector<8x1xf32>
      %32 = arith.divf %30, %31 : vector<8x1xf32>
      %33 = vector.broadcast %32 : vector<8x1xf32> to vector<8x32xf32>
      %34 = arith.subf %26, %33 : vector<8x32xf32>
      %35 = arith.mulf %34, %34 : vector<8x32xf32>
      %cst_28 = arith.constant dense<0.000000e+00> : vector<8xf32>
      %36 = vector.multi_reduction <add>, %35, %cst_28 [1] : vector<8x32xf32> to vector<8xf32>
      %37 = vector.shape_cast %36 : vector<8xf32> to vector<8x1xf32>
      %cst_29 = arith.constant 3.200000e+01 : f32
      %38 = vector.broadcast %cst_29 : f32 to vector<8x1xf32>
      %39 = arith.divf %37, %38 : vector<8x1xf32>
      %cst_30 = arith.constant 9.99999974E-6 : f32
      %40 = vector.broadcast %cst_30 : f32 to vector<8x1xf32>
      %41 = arith.addf %39, %40 : vector<8x1xf32>
      %42 = math.rsqrt %41 : vector<8x1xf32>
      %43 = vector.broadcast %42 : vector<8x1xf32> to vector<8x32xf32>
      %44 = arith.mulf %34, %43 : vector<8x32xf32>
      %45 = vector.broadcast %27 : vector<1x32xf32> to vector<8x32xf32>
      %46 = arith.mulf %44, %45 : vector<8x32xf32>
      %47 = vector.broadcast %28 : vector<1x32xf32> to vector<8x32xf32>
      %48 = arith.addf %46, %47 : vector<8x32xf32>
      %c0_31 = arith.constant 0 : index
      %c0_32 = arith.constant 0 : index
      %49 = vector.load %arg21[%c0_31, %c0_32] : memref<8x32xf32, #tpu.memory_space<vmem>>, vector<8x32xf32>
      tpu.vector_store %arg21[%c0_31, %c0_32], %48 {strides = array<i32>} : memref<8x32xf32, #tpu.memory_space<vmem>>, vector<8x32xf32>,
    } else {
    }
    return
  }
  func.func @transform_0(%arg0: i32, %arg1: i32, %arg2: memref<1xi32, #tpu.memory_space<smem>>) -> (i32, i32) {
    %c0_i32 = arith.constant 0 : i32
    %c0_i32_0 = arith.constant 0 : i32
    return %arg0, %c0_i32 : i32, i32
  }
  func.func @transform_1(%arg0: i32, %arg1: i32, %arg2: memref<1xi32, #tpu.memory_space<smem>>) -> (i32, i32) {
    %c0_i32 = arith.constant 0 : i32
    %c0_i32_0 = arith.constant 0 : i32
    %c0_i32_1 = arith.constant 0 : i32
    return %c0_i32, %c0_i32_0 : i32, i32
  }
  func.func @transform_2(%arg0: i32, %arg1: i32, %arg2: memref<1xi32, #tpu.memory_space<smem>>) -> (i32, i32) {
    %c0_i32 = arith.constant 0 : i32
    %c0_i32_0 = arith.constant 0 : i32
    %c0_i32_1 = arith.constant 0 : i32
    return %c0_i32, %c0_i32_0 : i32, i32
  }
  func.func @transform_3(%arg0: i32, %arg1: i32, %arg2: memref<1xi32, #tpu.memory_space<smem>>) -> (i32, i32) {
    %c0_i32 = arith.constant 0 : i32
    %c0_i32_0 = arith.constant 0 : i32
    %c0_i32_1 = arith.constant 0 : i32
    return %c0_i32, %c0_i32_0 : i32, i32
  }
  func.func @transform_4(%arg0: i32, %arg1: i32, %arg2: memref<1xi32, #tpu.memory_space<smem>>) -> (i32, i32) {
    %c0_i32 = arith.constant 0 : i32
    %c0_i32_0 = arith.constant 0 : i32
    %c0_i32_1 = arith.constant 0 : i32
    return %c0_i32, %c0_i32_0 : i32, i32
  }
  func.func @transform_5(%arg0: i32, %arg1: i32, %arg2: memref<1xi32, #tpu.memory_space<smem>>) -> (i32, i32) {
    %c0_i32 = arith.constant 0 : i32
    %c0_i32_0 = arith.constant 0 : i32
    %c0_i32_1 = arith.constant 0 : i32
    return %c0_i32, %c0_i32_0 : i32, i32
  }
  func.func @transform_6(%arg0: i32, %arg1: i32, %arg2: memref<1xi32, #tpu.memory_space<smem>>) -> (i32, i32) {
    %c0_i32 = arith.constant 0 : i32
    %c0_i32_0 = arith.constant 0 : i32
    %c0_i32_1 = arith.constant 0 : i32
    return %c0_i32, %c0_i32_0 : i32, i32
  }
  func.func @transform_7(%arg0: i32, %arg1: i32, %arg2: memref<1xi32, #tpu.memory_space<smem>>) -> (i32, i32) {
    %c0_i32 = arith.constant 0 : i32
    %c0_i32_0 = arith.constant 0 : i32
    %c0_i32_1 = arith.constant 0 : i32
    return %c0_i32, %c0_i32_0 : i32, i32
  }
  func.func @transform_8(%arg0: i32, %arg1: i32, %arg2: memref<1xi32, #tpu.memory_space<smem>>) -> (i32, i32) {
    %c0_i32 = arith.constant 0 : i32
    %c0_i32_0 = arith.constant 0 : i32
    %c0_i32_1 = arith.constant 0 : i32
    return %c0_i32, %c0_i32_0 : i32, i32
  }
  func.func @transform_9(%arg0: i32, %arg1: i32, %arg2: memref<1xi32, #tpu.memory_space<smem>>) -> (i32, i32) {
    %c0_i32 = arith.constant 0 : i32
    %c0_i32_0 = arith.constant 0 : i32
    %c0_i32_1 = arith.constant 0 : i32
    return %c0_i32, %c0_i32_0 : i32, i32
  }
  func.func @transform_10(%arg0: i32, %arg1: i32, %arg2: memref<1xi32, #tpu.memory_space<smem>>) -> (i32, i32) {
    %c0_i32 = arith.constant 0 : i32
    %c0_i32_0 = arith.constant 0 : i32
    %c0_i32_1 = arith.constant 0 : i32
    return %c0_i32, %c0_i32_0 : i32, i32
  }
  func.func @transform_11(%arg0: i32, %arg1: i32, %arg2: memref<1xi32, #tpu.memory_space<smem>>) -> (i32, i32) {
    %c0_i32 = arith.constant 0 : i32
    %c0_i32_0 = arith.constant 0 : i32
    %c0_i32_1 = arith.constant 0 : i32
    return %c0_i32, %c0_i32_0 : i32, i32
  }
  func.func @transform_12(%arg0: i32, %arg1: i32, %arg2: memref<1xi32, #tpu.memory_space<smem>>) -> (i32, i32) {
    %c0_i32 = arith.constant 0 : i32
    %c0_i32_0 = arith.constant 0 : i32
    return %c0_i32, %arg1 : i32, i32
  }
  func.func @transform_13(%arg0: i32, %arg1: i32, %arg2: memref<1xi32, #tpu.memory_space<smem>>) -> (i32, i32) {
    %c0_i32 = arith.constant 0 : i32
    %c0_i32_0 = arith.constant 0 : i32
    return %c0_i32, %arg1 : i32, i32
  }
  func.func @transform_14(%arg0: i32, %arg1: i32, %arg2: memref<1xi32, #tpu.memory_space<smem>>) -> (i32, i32) {
    %c0_i32 = arith.constant 0 : i32
    %c0_i32_0 = arith.constant 0 : i32
    return %arg1, %c0_i32 : i32, i32
  }
  func.func @transform_15(%arg0: i32, %arg1: i32, %arg2: memref<1xi32, #tpu.memory_space<smem>>) -> (i32, i32) {
    %c0_i32 = arith.constant 0 : i32
    %c0_i32_0 = arith.constant 0 : i32
    %c0_i32_1 = arith.constant 0 : i32
    return %c0_i32, %c0_i32_0 : i32, i32
  }
  func.func @transform_16(%arg0: i32, %arg1: i32, %arg2: memref<1xi32, #tpu.memory_space<smem>>) -> (i32, i32) {
    %c0_i32 = arith.constant 0 : i32
    %c0_i32_0 = arith.constant 0 : i32
    %c0_i32_1 = arith.constant 0 : i32
    return %c0_i32, %c0_i32_0 : i32, i32
  }
  func.func @transform_17(%arg0: i32, %arg1: i32, %arg2: memref<1xi32, #tpu.memory_space<smem>>) -> (i32, i32) {
    %c0_i32 = arith.constant 0 : i32
    %c0_i32_0 = arith.constant 0 : i32
    %c0_i32_1 = arith.constant 0 : i32
    return %c0_i32, %c0_i32_0 : i32, i32
  }
  func.func @transform_18(%arg0: i32, %arg1: i32, %arg2: memref<1xi32, #tpu.memory_space<smem>>) -> (i32, i32) {
    %c0_i32 = arith.constant 0 : i32
    %c0_i32_0 = arith.constant 0 : i32
    return %arg0, %c0_i32 : i32, i32
  }
  func.func @transform_19(%arg0: i32, %arg1: i32, %arg2: memref<1xi32, #tpu.memory_space<smem>>) -> (i32, i32) {
    %c0_i32 = arith.constant 0 : i32
    %c0_i32_0 = arith.constant 0 : i32
    return %c0_i32, %arg0 : i32, i32
  }
}

</mosaic_0001>

<llo_original>
// kernel: _layer_forward.1
$region0: #{_layer_forward.1}
  #allocation0 [shape = 'u32[]', space=smem, size = 0x4, offset = 0x4, fixed_abs, tag = 'smem constant byte address 0x4 - core index']
  #allocation1 [shape = 'u32[72,128]{1,0:T(1,128)}', space=vmem, size = 0x9000, scoped, tag = 'internal scratch']
  #allocation2 [shape = 'f32[8,32]{1,0:T(8,128)}', space=vmem, size = 0x1000, scoped, tag = 'scratch operand']
  #allocation3 [shape = 'f32[8,32]{1,0:T(8,128)}', space=vmem, size = 0x1000, scoped, tag = 'scratch operand']
  #allocation4 [shape = 's32[1]{0}', space=sflag, size = 0x4, scoped, tag = 'scoped memory for _layer_forward.1']
  #allocation5 [shape = 's32[1]{0:T(128)S(6)}', space=smem, size = 0x200, scoped, tag = 'prefetched SMEM operand 0']
  %s0 = inlined_call_operand.<no memory space> [shape: s32[1], index: 0, kind: input, shape index: {}]
  %s1 = inlined_call_operand.hbm [shape: f32[8,32], index: 1, kind: input, shape index: {}]
  %s2 = inlined_call_operand.vmem [shape: bf16[32,32], index: 2, kind: input, shape index: {}]
  %s3 = inlined_call_operand.vmem [shape: bf16[32,32], index: 3, kind: input, shape index: {}]
  %s4 = inlined_call_operand.vmem [shape: f32[1,32], index: 4, kind: input, shape index: {}]
  %s5 = inlined_call_operand.vmem [shape: bf16[32,32], index: 5, kind: input, shape index: {}]
  %s6 = inlined_call_operand.vmem [shape: f32[1,32], index: 6, kind: input, shape index: {}]
  %s7 = inlined_call_operand.vmem [shape: bf16[32,32], index: 7, kind: input, shape index: {}]
  %s8 = inlined_call_operand.vmem [shape: f32[1,32], index: 8, kind: input, shape index: {}]
  %s9 = inlined_call_operand.vmem [shape: bf16[32,32], index: 9, kind: input, shape index: {}]
  %s10 = inlined_call_operand.vmem [shape: f32[1,32], index: 10, kind: input, shape index: {}]
  %s11 = inlined_call_operand.vmem [shape: f32[1,32], index: 11, kind: input, shape index: {}]
  %s12 = inlined_call_operand.vmem [shape: f32[1,32], index: 12, kind: input, shape index: {}]
  %s13 = inlined_call_operand.hbm [shape: bf16[32,128], index: 13, kind: input, shape index: {}]
  %s14 = inlined_call_operand.hbm [shape: f32[1,128], index: 14, kind: input, shape index: {}]
  %s15 = inlined_call_operand.vmem [shape: bf16[128,32], index: 15, kind: input, shape index: {}]
  %s16 = inlined_call_operand.hbm [shape: f32[1,32], index: 16, kind: input, shape index: {}]
  %s17 = inlined_call_operand.vmem [shape: f32[1,32], index: 17, kind: input, shape index: {}]
  %s18 = inlined_call_operand.vmem [shape: f32[1,32], index: 18, kind: input, shape index: {}]
  %s19 = inlined_call_operand.hbm [shape: f32[8,32], index: 19, kind: output, shape index: {0}]
  %s20 = inlined_call_operand.vmem [shape: f32[1,128], index: 20, kind: output, shape index: {1}]
  %21 = xla_tuple %s19, %s20
  %s22 = sld [smem:[#allocation0]]
  $region114: #{_layer_forward.1} parent=0
    _
  %s24 = ssub.s32 1, %s22
  %s25 = scalar_select 0, %s24, %s22
  %26 = sst [smem:[#allocation5]] %s0
  $region1: #{_layer_forward.1} parent=0
    #allocation6 [shape = 'u8[4096]{0}', space=vmem, size = 0x1000, scoped, tag = 'input window, operand 1, single buffered']
    #allocation7 [shape = 's32[1]{0}', space=sflag, size = 0x4, scoped, tag = 'scoped memory for _layer_forward.1']
    #allocation8 [shape = 's32[1]{0}', space=sflag, size = 0x4, scoped, tag = 'scoped memory for _layer_forward.1']
    #allocation9 [shape = 'u8[8192]{0}', space=vmem, size = 0x2000, scoped, tag = 'input window, operand 13, single buffered']
    #allocation10 [shape = 's32[1]{0}', space=sflag, size = 0x4, scoped, tag = 'scoped memory for _layer_forward.1']
    #allocation11 [shape = 'u8[512]{0}', space=vmem, size = 0x400, scoped, tag = 'input window, operand 14, single buffered']
    #allocation12 [shape = 'u8[512]{0}', space=vmem, size = 0x400, scoped, tag = 'input window, operand 16, single buffered']
    #allocation13 [shape = 's32[1]{0}', space=sflag, size = 0x4, scoped, tag = 'scoped memory for _layer_forward.1']
    #allocation14 [shape = 'u8[4096]{0}', space=vmem, size = 0x1000, scoped, tag = 'output window, operand 0, single buffered']
    %27 = vsyncpa [#allocation7], 0
    %28 = vsyncpa [#allocation10], 0
    %29 = vsyncpa [#allocation13], 0
    %30 = vsyncpa [#allocation8], 0
    // Predicated region
    $region2: #{_layer_forward.1} parent=1 // pred_check
      _
    $region3: #{_layer_forward.1} parent=1 // pred_check_branch
      %32 = sbr.rel (0) target = $region5
    $region4: #{_layer_forward.1} parent=1 // pred_region
      %34 = vsyncadd [#allocation7], 0
      %s36 = sshll.u32 %s1, 4
      %s37 = int_to_ptr.hbm [resolvable:$true] %s36
      %s38 = sshll.u32 [#allocation6], 4
      %s39 = int_to_ptr.vmem [resolvable:$true] %s38
      %41 = dma.hbm_to_vmem [thread:$0]  %s37, 128, %s39, [#allocation7]
    $region5: #{_layer_forward.1} parent=1 // pred_fallthru
      _
    // Predicated region
    $region6: #{_layer_forward.1} parent=1 // pred_check
      _
    $region7: #{_layer_forward.1} parent=1 // pred_check_branch
      %43 = sbr.rel (0) target = $region9
    $region8: #{_layer_forward.1} parent=1 // pred_region
      _
    $region9: #{_layer_forward.1} parent=1 // pred_fallthru
      _
    // Predicated region
    $region10: #{_layer_forward.1} parent=1 // pred_check
      _
    $region11: #{_layer_forward.1} parent=1 // pred_check_branch
      %45 = sbr.rel (0) target = $region13
    $region12: #{_layer_forward.1} parent=1 // pred_region
      _
    $region13: #{_layer_forward.1} parent=1 // pred_fallthru
      _
    // Predicated region
    $region14: #{_layer_forward.1} parent=1 // pred_check
      _
    $region15: #{_layer_forward.1} parent=1 // pred_check_branch
      %47 = sbr.rel (0) target = $region17
    $region16: #{_layer_forward.1} parent=1 // pred_region
      _
    $region17: #{_layer_forward.1} parent=1 // pred_fallthru
      _
    // Predicated region
    $region18: #{_layer_forward.1} parent=1 // pred_check
      _
    $region19: #{_layer_forward.1} parent=1 // pred_check_branch
      %49 = sbr.rel (0) target = $region21
    $region20: #{_layer_forward.1} parent=1 // pred_region
      _
    $region21: #{_layer_forward.1} parent=1 // pred_fallthru
      _
    // Predicated region
    $region22: #{_layer_forward.1} parent=1 // pred_check
      _
    $region23: #{_layer_forward.1} parent=1 // pred_check_branch
      %51 = sbr.rel (0) target = $region25
    $region24: #{_layer_forward.1} parent=1 // pred_region
      _
    $region25: #{_layer_forward.1} parent=1 // pred_fallthru
      _
    // Predicated region
    $region26: #{_layer_forward.1} parent=1 // pred_check
      _
    $region27: #{_layer_forward.1} parent=1 // pred_check_branch
      %53 = sbr.rel (0) target = $region29
    $region28: #{_layer_forward.1} parent=1 // pred_region
      _
    $region29: #{_layer_forward.1} parent=1 // pred_fallthru
      _
    // Predicated region
    $region30: #{_layer_forward.1} parent=1 // pred_check
      _
    $region31: #{_layer_forward.1} parent=1 // pred_check_branch
      %55 = sbr.rel (0) target = $region33
    $region32: #{_layer_forward.1} parent=1 // pred_region
      _
    $region33: #{_layer_forward.1} parent=1 // pred_fallthru
      _
    // Predicated region
    $region34: #{_layer_forward.1} parent=1 // pred_check
      _
    $region35: #{_layer_forward.1} parent=1 // pred_check_branch
      %57 = sbr.rel (0) target = $region37
    $region36: #{_layer_forward.1} parent=1 // pred_region
      _
    $region37: #{_layer_forward.1} parent=1 // pred_fallthru
      _
    // Predicated region
    $region38: #{_layer_forward.1} parent=1 // pred_check
      _
    $region39: #{_layer_forward.1} parent=1 // pred_check_branch
      %59 = sbr.rel (0) target = $region41
    $region40: #{_layer_forward.1} parent=1 // pred_region
      _
    $region41: #{_layer_forward.1} parent=1 // pred_fallthru
      _
    // Predicated region
    $region42: #{_layer_forward.1} parent=1 // pred_check
      _
    $region43: #{_layer_forward.1} parent=1 // pred_check_branch
      %61 = sbr.rel (0) target = $region45
    $region44: #{_layer_forward.1} parent=1 // pred_region
      _
    $region45: #{_layer_forward.1} parent=1 // pred_fallthru
      _
    // Predicated region
    $region46: #{_layer_forward.1} parent=1 // pred_check
      _
    $region47: #{_layer_forward.1} parent=1 // pred_check_branch
      %63 = sbr.rel (0) target = $region49
    $region48: #{_layer_forward.1} parent=1 // pred_region
      _
    $region49: #{_layer_forward.1} parent=1 // pred_fallthru
      _
    // Predicated region
    $region50: #{_layer_forward.1} parent=1 // pred_check
      _
    $region51: #{_layer_forward.1} parent=1 // pred_check_branch
      %65 = sbr.rel (0) target = $region53
    $region52: #{_layer_forward.1} parent=1 // pred_region
      %67 = vsyncadd [#allocation10], 0
      %s68 = sshll.u32 %s13, 4
      %s69 = int_to_ptr.hbm [resolvable:$true] %s68
      %s70 = sshll.u32 [#allocation9], 4
      %s71 = int_to_ptr.vmem [resolvable:$true] %s70
      %76 = dma.hbm_to_vmem [thread:$0]  %s69, 256, %s71, [#allocation10], 64, 64, 4
    $region53: #{_layer_forward.1} parent=1 // pred_fallthru
      _
    // Predicated region
    $region54: #{_layer_forward.1} parent=1 // pred_check
      _
    $region55: #{_layer_forward.1} parent=1 // pred_check_branch
      %78 = sbr.rel (0) target = $region57
    $region56: #{_layer_forward.1} parent=1 // pred_region
      %80 = vsyncadd [#allocation10], 0
      %s82 = sshll.u32 %s14, 4
      %s83 = int_to_ptr.hbm [resolvable:$true] %s82
      %s84 = sshll.u32 [#allocation11], 4
      %s85 = int_to_ptr.vmem [resolvable:$true] %s84
      %87 = dma.hbm_to_vmem [thread:$0]  %s83, 16, %s85, [#allocation10]
    $region57: #{_layer_forward.1} parent=1 // pred_fallthru
      _
    // Predicated region
    $region58: #{_layer_forward.1} parent=1 // pred_check
      _
    $region59: #{_layer_forward.1} parent=1 // pred_check_branch
      %89 = sbr.rel (0) target = $region61
    $region60: #{_layer_forward.1} parent=1 // pred_region
      _
    $region61: #{_layer_forward.1} parent=1 // pred_fallthru
      _
    // Predicated region
    $region62: #{_layer_forward.1} parent=1 // pred_check
      _
    $region63: #{_layer_forward.1} parent=1 // pred_check_branch
      %91 = sbr.rel (0) target = $region65
    $region64: #{_layer_forward.1} parent=1 // pred_region
      %93 = vsyncadd [#allocation13], 0
      %s95 = sshll.u32 %s16, 4
      %s96 = int_to_ptr.hbm [resolvable:$true] %s95
      %s97 = sshll.u32 [#allocation12], 4
      %s98 = int_to_ptr.vmem [resolvable:$true] %s97
      %100 = dma.hbm_to_vmem [thread:$0]  %s96, 16, %s98, [#allocation13]
    $region65: #{_layer_forward.1} parent=1 // pred_fallthru
      _
    // Predicated region
    $region66: #{_layer_forward.1} parent=1 // pred_check
      _
    $region67: #{_layer_forward.1} parent=1 // pred_check_branch
      %102 = sbr.rel (0) target = $region69
    $region68: #{_layer_forward.1} parent=1 // pred_region
      _
    $region69: #{_layer_forward.1} parent=1 // pred_fallthru
      _
    // Predicated region
    $region70: #{_layer_forward.1} parent=1 // pred_check
      _
    $region71: #{_layer_forward.1} parent=1 // pred_check_branch
      %104 = sbr.rel (0) target = $region73
    $region72: #{_layer_forward.1} parent=1 // pred_region
      _
    $region73: #{_layer_forward.1} parent=1 // pred_fallthru
      _
    // Predicated region
    $region74: #{_layer_forward.1} parent=1 // pred_check
      _
    $region75: #{_layer_forward.1} parent=1 // pred_check_branch
      %106 = sbr.rel (0) target = $region77
    $region76: #{_layer_forward.1} parent=1 // pred_region
      %108 = dma.done [#allocation7], 128
    $region77: #{_layer_forward.1} parent=1 // pred_fallthru
      _
    // Predicated region
    $region78: #{_layer_forward.1} parent=1 // pred_check
      _
    $region79: #{_layer_forward.1} parent=1 // pred_check_branch
      %110 = sbr.rel (0) target = $region81
    $region80: #{_layer_forward.1} parent=1 // pred_region
      %112 = dma.done [#allocation10], 256
    $region81: #{_layer_forward.1} parent=1 // pred_fallthru
      _
    // Predicated region
    $region82: #{_layer_forward.1} parent=1 // pred_check
      _
    $region83: #{_layer_forward.1} parent=1 // pred_check_branch
      %114 = sbr.rel (0) target = $region85
    $region84: #{_layer_forward.1} parent=1 // pred_region
      %116 = dma.done [#allocation10], 16
    $region85: #{_layer_forward.1} parent=1 // pred_fallthru
      _
    // Predicated region
    $region86: #{_layer_forward.1} parent=1 // pred_check
      _
    $region87: #{_layer_forward.1} parent=1 // pred_check_branch
      %118 = sbr.rel (0) target = $region89
    $region88: #{_layer_forward.1} parent=1 // pred_region
      %120 = dma.done [#allocation13], 16
    $region89: #{_layer_forward.1} parent=1 // pred_fallthru
      _
    %p122 = scmp.eq.s32.totalorder 0, 0
    // Predicated region
    $region90: #{_layer_forward.1} parent=1 // pred_check
      %p123 = pneg %p122
    $region91: #{_layer_forward.1} parent=1 // pred_check_branch
      %125 = sbr.rel (%p123) target = $region93
    $region92: #{_layer_forward.1} parent=1 // pred_region
      %v126 = vld [vmem:[#allocation6] sm:$0xff]
      %v127 = vpack.c.bf16 %v126, %v126
      %v128 = vld [vmem:[%s2] sm:$0xf]
      %v129 = vld [vmem:[%s2 + $0x4] sm:$0xf]
      %v130 = vld [vmem:[%s2 + $0x8] sm:$0xf]
      %v131 = vld [vmem:[%s2 + $0xc] sm:$0xf]
      %v132 = vld [vmem:[%s3] sm:$0xf]
      %v133 = vld [vmem:[%s3 + $0x4] sm:$0xf]
      %v134 = vld [vmem:[%s3 + $0x8] sm:$0xf]
      %v135 = vld [vmem:[%s3 + $0xc] sm:$0xf]
      %v136 = vld [vmem:[%s4] sm:$0x1]
      %v138 = vperm.slane %v136, 0
      %v144 = vunpack.c.l.b16 %v132
      %v145 = vunpack.c.l.b16 %v133
      %v146 = vunpack.c.l.b16 %v134
      %v147 = vunpack.c.l.b16 %v135
      %v148 = vpack.c.b16 %v145, %v144
      %v149 = vpack.c.b16 %v147, %v146
      %vm152 = vcmask 261120
      %v154 = vsel %vm152, %v127, 0
      %156 = vmatpush.bf16.msra.mxu0 0
      %157 = vmatpush.bf16.msra.mxu0 0
      %158 = vmatpush.bf16.msra.mxu0 0
      %159 = vmatpush.bf16.msra.mxu0 0
      %160 = vmatpush.bf16.msra.mxu0 0
      %161 = vmatpush.bf16.msra.mxu0 0
      %162 = vmatpush.bf16.msra.mxu0 %v149
      %163 = vmatpush.bf16.msra.mxu0 %v148
      %164 = vmatmul.bf16.gmra.mxu0 %v154
      %v165 = vpop.f32.mrf.mxu0
      %v166 = vadd.f32 %v138, %v165
      %v167 = vpop.f32.mrf.mxu0
      %168 = vdwg.mxu0
      %v169 = vld [vmem:[%s5] sm:$0xf]
      %v170 = vld [vmem:[%s5 + $0x4] sm:$0xf]
      %v171 = vld [vmem:[%s5 + $0x8] sm:$0xf]
      %v172 = vld [vmem:[%s5 + $0xc] sm:$0xf]
      %v173 = vld [vmem:[%s6] sm:$0x1]
      %v175 = vperm.slane %v173, 0
      %v181 = vunpack.c.l.b16 %v128
      %v182 = vunpack.c.l.b16 %v129
      %v183 = vunpack.c.l.b16 %v130
      %v184 = vunpack.c.l.b16 %v131
      %v185 = vpack.c.b16 %v182, %v181
      %v186 = vpack.c.b16 %v184, %v183
      %v191 = vunpack.c.l.b16 %v169
      %v192 = vunpack.c.l.b16 %v170
      %v193 = vunpack.c.l.b16 %v171
      %v194 = vunpack.c.l.b16 %v172
      %v195 = vpack.c.b16 %v192, %v191
      %v196 = vpack.c.b16 %v194, %v193
      %v200 = vsel %vm152, %v185, 0
      %v203 = vsel %vm152, %v186, 0
      %205 = vmatpush.bf16.msra.mxu0 0
      %206 = vmatpush.bf16.msra.mxu0 0
      %207 = vmatpush.bf16.msra.mxu0 0
      %208 = vmatpush.bf16.msra.mxu0 0
      %209 = vmatpush.bf16.msra.mxu0 0
      %210 = vmatpush.bf16.msra.mxu0 0
      %211 = vmatpush.bf16.msra.mxu0 %v196
      %212 = vmatpush.bf16.msra.mxu0 %v195
      %213 = vmatmul.bf16.gmra.mxu0 %v200
      %v214 = vpop.f32.mrf.mxu0
      %v215 = vadd.f32 %v175, %v214
      %v216 = vpop.f32.mrf.mxu0
      %v217 = vadd.f32 %v175, %v216
      %218 = vmatmul.bf16.gmra.mxu0 %v203
      %v219 = vpop.f32.mrf.mxu0
      %v220 = vadd.f32 %v175, %v219
      %v221 = vpop.f32.mrf.mxu0
      %v222 = vadd.f32 %v175, %v221
      %223 = vdwg.mxu0
      %v224 = vld [vmem:[%s7] sm:$0xf]
      %v225 = vld [vmem:[%s7 + $0x4] sm:$0xf]
      %v226 = vld [vmem:[%s7 + $0x8] sm:$0xf]
      %v227 = vld [vmem:[%s7 + $0xc] sm:$0xf]
      %v228 = vld [vmem:[%s8] sm:$0x1]
      %v230 = vperm.slane %v228, 0
      %v236 = vunpack.c.l.b16 %v224
      %v237 = vunpack.c.l.b16 %v225
      %v238 = vunpack.c.l.b16 %v226
      %v239 = vunpack.c.l.b16 %v227
      %v240 = vpack.c.b16 %v237, %v236
      %v241 = vpack.c.b16 %v239, %v238
      %244 = vmatpush.bf16.msra.mxu0 0
      %245 = vmatpush.bf16.msra.mxu0 0
      %246 = vmatpush.bf16.msra.mxu0 0
      %247 = vmatpush.bf16.msra.mxu0 0
      %248 = vmatpush.bf16.msra.mxu0 0
      %249 = vmatpush.bf16.msra.mxu0 0
      %250 = vmatpush.bf16.msra.mxu0 %v241
      %251 = vmatpush.bf16.msra.mxu0 %v240
      %252 = vmatmul.bf16.gmra.mxu0 %v200
      %v253 = vpop.f32.mrf.mxu0
      %v254 = vadd.f32 %v230, %v253
      %v255 = vpop.f32.mrf.mxu0
      %v256 = vadd.f32 %v230, %v255
      %257 = vmatmul.bf16.gmra.mxu0 %v203
      %v258 = vpop.f32.mrf.mxu0
      %v259 = vadd.f32 %v230, %v258
      %v260 = vpop.f32.mrf.mxu0
      %v261 = vadd.f32 %v230, %v260
      %262 = vdwg.mxu0
      %264 = vrot.lane.b32.xlu0 %v166, 112
      %v265 = vpop.permute.xlu0 %264
      %v267 = vrot.slane %v166, 4
      %vm268 = vcmask 1047556
      %v269 = vsel %vm268, 0.0, %v267
      %v271 = vunpack.c.l.s4 1983009808
      %v272 = vunpack.c.0.s8 %v271
      %v273 = vperm.slane %v166, %v272
      %v275 = vunpack.c.l.s4 1983009808
      %v276 = vunpack.c.0.s8 %v275
      %v277 = vperm.slane %v269, %v276
      %v278 = vrot.slane %v265, 4
      %v279 = vsel %vm268, 0.0, %v278
      %v281 = vunpack.c.l.s4 1983009808
      %v282 = vunpack.c.0.s8 %v281
      %v283 = vperm.slane %v265, %v282
      %v285 = vunpack.c.l.s4 1983009808
      %v286 = vunpack.c.0.s8 %v285
      %v287 = vperm.slane %v279, %v286
      %v288 = vrot.slane %v283, 4
      %v289 = vsel %vm268, %v288, %v273
      %v290 = vrot.slane %v273, 4
      %v291 = vsel %vm268, %v283, %v290
      %v293 = vunpack.c.l.s4 1934713408
      %v294 = vunpack.c.0.s8 %v293
      %v295 = vperm.slane %v289, %v294
      %v297 = vunpack.c.l.s4 1934713408
      %v298 = vunpack.c.0.s8 %v297
      %v299 = vperm.slane %v291, %v298
      %v300 = vrot.slane %v287, 4
      %v301 = vsel %vm268, %v300, %v277
      %v302 = vrot.slane %v277, 4
      %v303 = vsel %vm268, %v287, %v302
      %v305 = vunpack.c.l.s4 1934713408
      %v306 = vunpack.c.0.s8 %v305
      %v307 = vperm.slane %v301, %v306
      %v309 = vunpack.c.l.s4 1934713408
      %v310 = vunpack.c.0.s8 %v309
      %v311 = vperm.slane %v303, %v310
      %v312 = vrot.slane %v295, 4
      %v313 = vsel %vm268, 0.0, %v312
      %v314 = vrot.slane %v299, 4
      %v315 = vsel %vm268, 0.0, %v314
      %v316 = vrot.slane %v307, 4
      %v317 = vsel %vm268, 0.0, %v316
      %v318 = vrot.slane %v311, 4
      %v319 = vsel %vm268, 0.0, %v318
      %v320 = vpack.c.bf16 %v295, %v295
      %v321 = vpack.c.bf16 %v313, %v313
      %v322 = vpack.c.bf16 %v299, %v299
      %v323 = vpack.c.bf16 %v315, %v315
      %v324 = vpack.c.bf16 %v307, %v307
      %v325 = vpack.c.bf16 %v317, %v317
      %v326 = vpack.c.bf16 %v311, %v311
      %v327 = vpack.c.bf16 %v319, %v319
      %v328 = vrot.slane %v324, 4
      %vm329 = vcmask 1047556
      %v330 = vsel %vm329, %v328, %v320
      %v332 = vunpack.c.l.s4 1983009808
      %v333 = vunpack.c.0.s8 %v332
      %v334 = vperm.slane %v330, %v333
      %v335 = vrot.slane %v326, 4
      %v336 = vsel %vm329, %v335, %v322
      %v338 = vunpack.c.l.s4 1983009808
      %v339 = vunpack.c.0.s8 %v338
      %v340 = vperm.slane %v336, %v339
      %v341 = vrot.slane %v340, 4
      %v342 = vsel %vm329, %v341, %v334
      %v344 = vunpack.c.l.s4 1934713408
      %v345 = vunpack.c.0.s8 %v344
      %v346 = vperm.slane %v342, %v345
      %v347 = vrot.slane %v325, 4
      %v348 = vsel %vm329, %v347, %v321
      %v350 = vunpack.c.l.s4 1983009808
      %v351 = vunpack.c.0.s8 %v350
      %v352 = vperm.slane %v348, %v351
      %v353 = vrot.slane %v327, 4
      %v354 = vsel %vm329, %v353, %v323
      %v356 = vunpack.c.l.s4 1983009808
      %v357 = vunpack.c.0.s8 %v356
      %v358 = vperm.slane %v354, %v357
      %v359 = vrot.slane %v358, 4
      %v360 = vsel %vm329, %v359, %v352
      %v362 = vunpack.c.l.s4 1934713408
      %v363 = vunpack.c.0.s8 %v362
      %v364 = vperm.slane %v360, %v363
      %v367 = vpack.i.b16 %v364, %v346
      %v368 = vshrl.u32 %v346, 16
      %v369 = vshrl.u32 %v364, 16
      %v370 = vpack.i.b16 %v369, %v368
      %375 = vrot.lane.b32.xlu0 %v215, 112
      %v376 = vpop.permute.xlu0 %375
      %377 = vrot.lane.b32.xlu0 %v217, 112
      %v378 = vpop.permute.xlu0 %377
      %379 = vrot.lane.b32.xlu0 %v220, 112
      %v380 = vpop.permute.xlu0 %379
      %381 = vrot.lane.b32.xlu0 %v222, 112
      %v382 = vpop.permute.xlu0 %381
      %v387 = vrot.slane %v215, 4
      %v388 = vsel %vm268, 0.0, %v387
      %v390 = vunpack.c.l.s4 1983009808
      %v391 = vunpack.c.0.s8 %v390
      %v392 = vperm.slane %v215, %v391
      %v394 = vunpack.c.l.s4 1983009808
      %v395 = vunpack.c.0.s8 %v394
      %v396 = vperm.slane %v388, %v395
      %v397 = vrot.slane %v376, 4
      %v398 = vsel %vm268, 0.0, %v397
      %v400 = vunpack.c.l.s4 1983009808
      %v401 = vunpack.c.0.s8 %v400
      %v402 = vperm.slane %v376, %v401
      %v404 = vunpack.c.l.s4 1983009808
      %v405 = vunpack.c.0.s8 %v404
      %v406 = vperm.slane %v398, %v405
      %v407 = vrot.slane %v402, 4
      %v408 = vsel %vm268, %v407, %v392
      %v409 = vrot.slane %v392, 4
      %v410 = vsel %vm268, %v402, %v409
      %v412 = vunpack.c.l.s4 1934713408
      %v413 = vunpack.c.0.s8 %v412
      %v414 = vperm.slane %v408, %v413
      %v416 = vunpack.c.l.s4 1934713408
      %v417 = vunpack.c.0.s8 %v416
      %v418 = vperm.slane %v410, %v417
      %v419 = vrot.slane %v406, 4
      %v420 = vsel %vm268, %v419, %v396
      %v421 = vrot.slane %v396, 4
      %v422 = vsel %vm268, %v406, %v421
      %v424 = vunpack.c.l.s4 1934713408
      %v425 = vunpack.c.0.s8 %v424
      %v426 = vperm.slane %v420, %v425
      %v428 = vunpack.c.l.s4 1934713408
      %v429 = vunpack.c.0.s8 %v428
      %v430 = vperm.slane %v422, %v429
      %v431 = vrot.slane %v414, 4
      %v432 = vsel %vm268, 0.0, %v431
      %v433 = vrot.slane %v418, 4
      %v434 = vsel %vm268, 0.0, %v433
      %v435 = vrot.slane %v426, 4
      %v436 = vsel %vm268, 0.0, %v435
      %v437 = vrot.slane %v430, 4
      %v438 = vsel %vm268, 0.0, %v437
      %v439 = vrot.slane %v217, 4
      %v440 = vsel %vm268, 0.0, %v439
      %v442 = vunpack.c.l.s4 1983009808
      %v443 = vunpack.c.0.s8 %v442
      %v444 = vperm.slane %v217, %v443
      %v446 = vunpack.c.l.s4 1983009808
      %v447 = vunpack.c.0.s8 %v446
      %v448 = vperm.slane %v440, %v447
      %v449 = vrot.slane %v378, 4
      %v450 = vsel %vm268, 0.0, %v449
      %v452 = vunpack.c.l.s4 1983009808
      %v453 = vunpack.c.0.s8 %v452
      %v454 = vperm.slane %v378, %v453
      %v456 = vunpack.c.l.s4 1983009808
      %v457 = vunpack.c.0.s8 %v456
      %v458 = vperm.slane %v450, %v457
      %v459 = vrot.slane %v454, 4
      %v460 = vsel %vm268, %v459, %v444
      %v461 = vrot.slane %v444, 4
      %v462 = vsel %vm268, %v454, %v461
      %v464 = vunpack.c.l.s4 1934713408
      %v465 = vunpack.c.0.s8 %v464
      %v466 = vperm.slane %v460, %v465
      %v468 = vunpack.c.l.s4 1934713408
      %v469 = vunpack.c.0.s8 %v468
      %v470 = vperm.slane %v462, %v469
      %v471 = vrot.slane %v458, 4
      %v472 = vsel %vm268, %v471, %v448
      %v473 = vrot.slane %v448, 4
      %v474 = vsel %vm268, %v458, %v473
      %v476 = vunpack.c.l.s4 1934713408
      %v477 = vunpack.c.0.s8 %v476
      %v478 = vperm.slane %v472, %v477
      %v480 = vunpack.c.l.s4 1934713408
      %v481 = vunpack.c.0.s8 %v480
      %v482 = vperm.slane %v474, %v481
      %v483 = vrot.slane %v466, 4
      %v484 = vsel %vm268, 0.0, %v483
      %v485 = vrot.slane %v470, 4
      %v486 = vsel %vm268, 0.0, %v485
      %v487 = vrot.slane %v478, 4
      %v488 = vsel %vm268, 0.0, %v487
      %v489 = vrot.slane %v482, 4
      %v490 = vsel %vm268, 0.0, %v489
      %v491 = vrot.slane %v220, 4
      %v492 = vsel %vm268, 0.0, %v491
      %v494 = vunpack.c.l.s4 1983009808
      %v495 = vunpack.c.0.s8 %v494
      %v496 = vperm.slane %v220, %v495
      %v498 = vunpack.c.l.s4 1983009808
      %v499 = vunpack.c.0.s8 %v498
      %v500 = vperm.slane %v492, %v499
      %v501 = vrot.slane %v380, 4
      %v502 = vsel %vm268, 0.0, %v501
      %v504 = vunpack.c.l.s4 1983009808
      %v505 = vunpack.c.0.s8 %v504
      %v506 = vperm.slane %v380, %v505
      %v508 = vunpack.c.l.s4 1983009808
      %v509 = vunpack.c.0.s8 %v508
      %v510 = vperm.slane %v502, %v509
      %v511 = vrot.slane %v506, 4
      %v512 = vsel %vm268, %v511, %v496
      %v513 = vrot.slane %v496, 4
      %v514 = vsel %vm268, %v506, %v513
      %v516 = vunpack.c.l.s4 1934713408
      %v517 = vunpack.c.0.s8 %v516
      %v518 = vperm.slane %v512, %v517
      %v520 = vunpack.c.l.s4 1934713408
      %v521 = vunpack.c.0.s8 %v520
      %v522 = vperm.slane %v514, %v521
      %v523 = vrot.slane %v510, 4
      %v524 = vsel %vm268, %v523, %v500
      %v525 = vrot.slane %v500, 4
      %v526 = vsel %vm268, %v510, %v525
      %v528 = vunpack.c.l.s4 1934713408
      %v529 = vunpack.c.0.s8 %v528
      %v530 = vperm.slane %v524, %v529
      %v532 = vunpack.c.l.s4 1934713408
      %v533 = vunpack.c.0.s8 %v532
      %v534 = vperm.slane %v526, %v533
      %v535 = vrot.slane %v518, 4
      %v536 = vsel %vm268, 0.0, %v535
      %v537 = vrot.slane %v522, 4
      %v538 = vsel %vm268, 0.0, %v537
      %v539 = vrot.slane %v530, 4
      %v540 = vsel %vm268, 0.0, %v539
      %v541 = vrot.slane %v534, 4
      %v542 = vsel %vm268, 0.0, %v541
      %v543 = vrot.slane %v222, 4
      %v544 = vsel %vm268, 0.0, %v543
      %v546 = vunpack.c.l.s4 1983009808
      %v547 = vunpack.c.0.s8 %v546
      %v548 = vperm.slane %v222, %v547
      %v550 = vunpack.c.l.s4 1983009808
      %v551 = vunpack.c.0.s8 %v550
      %v552 = vperm.slane %v544, %v551
      %v553 = vrot.slane %v382, 4
      %v554 = vsel %vm268, 0.0, %v553
      %v556 = vunpack.c.l.s4 1983009808
      %v557 = vunpack.c.0.s8 %v556
      %v558 = vperm.slane %v382, %v557
      %v560 = vunpack.c.l.s4 1983009808
      %v561 = vunpack.c.0.s8 %v560
      %v562 = vperm.slane %v554, %v561
      %v563 = vrot.slane %v558, 4
      %v564 = vsel %vm268, %v563, %v548
      %v565 = vrot.slane %v548, 4
      %v566 = vsel %vm268, %v558, %v565
      %v568 = vunpack.c.l.s4 1934713408
      %v569 = vunpack.c.0.s8 %v568
      %v570 = vperm.slane %v564, %v569
      %v572 = vunpack.c.l.s4 1934713408
      %v573 = vunpack.c.0.s8 %v572
      %v574 = vperm.slane %v566, %v573
      %v575 = vrot.slane %v562, 4
      %v576 = vsel %vm268, %v575, %v552
      %v577 = vrot.slane %v552, 4
      %v578 = vsel %vm268, %v562, %v577
      %v580 = vunpack.c.l.s4 1934713408
      %v581 = vunpack.c.0.s8 %v580
      %v582 = vperm.slane %v576, %v581
      %v584 = vunpack.c.l.s4 1934713408
      %v585 = vunpack.c.0.s8 %v584
      %v586 = vperm.slane %v578, %v585
      %v587 = vrot.slane %v570, 4
      %v588 = vsel %vm268, 0.0, %v587
      %v589 = vrot.slane %v574, 4
      %v590 = vsel %vm268, 0.0, %v589
      %v591 = vrot.slane %v582, 4
      %v592 = vsel %vm268, 0.0, %v591
      %v593 = vrot.slane %v586, 4
      %v594 = vsel %vm268, 0.0, %v593
      %v595 = vpack.c.bf16 %v414, %v414
      %v596 = vpack.c.bf16 %v432, %v432
      %v597 = vpack.c.bf16 %v418, %v418
      %v598 = vpack.c.bf16 %v434, %v434
      %v599 = vpack.c.bf16 %v426, %v426
      %v600 = vpack.c.bf16 %v436, %v436
      %v601 = vpack.c.bf16 %v430, %v430
      %v602 = vpack.c.bf16 %v438, %v438
      %v603 = vpack.c.bf16 %v466, %v466
      %v604 = vpack.c.bf16 %v484, %v484
      %v605 = vpack.c.bf16 %v470, %v470
      %v606 = vpack.c.bf16 %v486, %v486
      %v607 = vpack.c.bf16 %v478, %v478
      %v608 = vpack.c.bf16 %v488, %v488
      %v609 = vpack.c.bf16 %v482, %v482
      %v610 = vpack.c.bf16 %v490, %v490
      %v611 = vpack.c.bf16 %v518, %v518
      %v612 = vpack.c.bf16 %v536, %v536
      %v613 = vpack.c.bf16 %v522, %v522
      %v614 = vpack.c.bf16 %v538, %v538
      %v615 = vpack.c.bf16 %v530, %v530
      %v616 = vpack.c.bf16 %v540, %v540
      %v617 = vpack.c.bf16 %v534, %v534
      %v618 = vpack.c.bf16 %v542, %v542
      %v619 = vpack.c.bf16 %v570, %v570
      %v620 = vpack.c.bf16 %v588, %v588
      %v621 = vpack.c.bf16 %v574, %v574
      %v622 = vpack.c.bf16 %v590, %v590
      %v623 = vpack.c.bf16 %v582, %v582
      %v624 = vpack.c.bf16 %v592, %v592
      %v625 = vpack.c.bf16 %v586, %v586
      %v626 = vpack.c.bf16 %v594, %v594
      %v627 = vrot.slane %v599, 4
      %v628 = vsel %vm329, %v627, %v595
      %v630 = vunpack.c.l.s4 1983009808
      %v631 = vunpack.c.0.s8 %v630
      %v632 = vperm.slane %v628, %v631
      %v633 = vrot.slane %v601, 4
      %v634 = vsel %vm329, %v633, %v597
      %v636 = vunpack.c.l.s4 1983009808
      %v637 = vunpack.c.0.s8 %v636
      %v638 = vperm.slane %v634, %v637
      %v639 = vrot.slane %v638, 4
      %v640 = vsel %vm329, %v639, %v632
      %v642 = vunpack.c.l.s4 1934713408
      %v643 = vunpack.c.0.s8 %v642
      %v644 = vperm.slane %v640, %v643
      %v645 = vrot.slane %v600, 4
      %v646 = vsel %vm329, %v645, %v596
      %v648 = vunpack.c.l.s4 1983009808
      %v649 = vunpack.c.0.s8 %v648
      %v650 = vperm.slane %v646, %v649
      %v651 = vrot.slane %v602, 4
      %v652 = vsel %vm329, %v651, %v598
      %v654 = vunpack.c.l.s4 1983009808
      %v655 = vunpack.c.0.s8 %v654
      %v656 = vperm.slane %v652, %v655
      %v657 = vrot.slane %v656, 4
      %v658 = vsel %vm329, %v657, %v650
      %v660 = vunpack.c.l.s4 1934713408
      %v661 = vunpack.c.0.s8 %v660
      %v662 = vperm.slane %v658, %v661
      %v663 = vrot.slane %v607, 4
      %v664 = vsel %vm329, %v663, %v603
      %v666 = vunpack.c.l.s4 1983009808
      %v667 = vunpack.c.0.s8 %v666
      %v668 = vperm.slane %v664, %v667
      %v669 = vrot.slane %v609, 4
      %v670 = vsel %vm329, %v669, %v605
      %v672 = vunpack.c.l.s4 1983009808
      %v673 = vunpack.c.0.s8 %v672
      %v674 = vperm.slane %v670, %v673
      %v675 = vrot.slane %v674, 4
      %v676 = vsel %vm329, %v675, %v668
      %v678 = vunpack.c.l.s4 1934713408
      %v679 = vunpack.c.0.s8 %v678
      %v680 = vperm.slane %v676, %v679
      %v681 = vrot.slane %v608, 4
      %v682 = vsel %vm329, %v681, %v604
      %v684 = vunpack.c.l.s4 1983009808
      %v685 = vunpack.c.0.s8 %v684
      %v686 = vperm.slane %v682, %v685
      %v687 = vrot.slane %v610, 4
      %v688 = vsel %vm329, %v687, %v606
      %v690 = vunpack.c.l.s4 1983009808
      %v691 = vunpack.c.0.s8 %v690
      %v692 = vperm.slane %v688, %v691
      %v693 = vrot.slane %v692, 4
      %v694 = vsel %vm329, %v693, %v686
      %v696 = vunpack.c.l.s4 1934713408
      %v697 = vunpack.c.0.s8 %v696
      %v698 = vperm.slane %v694, %v697
      %v699 = vrot.slane %v615, 4
      %v700 = vsel %vm329, %v699, %v611
      %v702 = vunpack.c.l.s4 1983009808
      %v703 = vunpack.c.0.s8 %v702
      %v704 = vperm.slane %v700, %v703
      %v705 = vrot.slane %v617, 4
      %v706 = vsel %vm329, %v705, %v613
      %v708 = vunpack.c.l.s4 1983009808
      %v709 = vunpack.c.0.s8 %v708
      %v710 = vperm.slane %v706, %v709
      %v711 = vrot.slane %v710, 4
      %v712 = vsel %vm329, %v711, %v704
      %v714 = vunpack.c.l.s4 1934713408
      %v715 = vunpack.c.0.s8 %v714
      %v716 = vperm.slane %v712, %v715
      %v717 = vrot.slane %v616, 4
      %v718 = vsel %vm329, %v717, %v612
      %v720 = vunpack.c.l.s4 1983009808
      %v721 = vunpack.c.0.s8 %v720
      %v722 = vperm.slane %v718, %v721
      %v723 = vrot.slane %v618, 4
      %v724 = vsel %vm329, %v723, %v614
      %v726 = vunpack.c.l.s4 1983009808
      %v727 = vunpack.c.0.s8 %v726
      %v728 = vperm.slane %v724, %v727
      %v729 = vrot.slane %v728, 4
      %v730 = vsel %vm329, %v729, %v722
      %v732 = vunpack.c.l.s4 1934713408
      %v733 = vunpack.c.0.s8 %v732
      %v734 = vperm.slane %v730, %v733
      %v735 = vrot.slane %v623, 4
      %v736 = vsel %vm329, %v735, %v619
      %v738 = vunpack.c.l.s4 1983009808
      %v739 = vunpack.c.0.s8 %v738
      %v740 = vperm.slane %v736, %v739
      %v741 = vrot.slane %v625, 4
      %v742 = vsel %vm329, %v741, %v621
      %v744 = vunpack.c.l.s4 1983009808
      %v745 = vunpack.c.0.s8 %v744
      %v746 = vperm.slane %v742, %v745
      %v747 = vrot.slane %v746, 4
      %v748 = vsel %vm329, %v747, %v740
      %v750 = vunpack.c.l.s4 1934713408
      %v751 = vunpack.c.0.s8 %v750
      %v752 = vperm.slane %v748, %v751
      %v753 = vrot.slane %v624, 4
      %v754 = vsel %vm329, %v753, %v620
      %v756 = vunpack.c.l.s4 1983009808
      %v757 = vunpack.c.0.s8 %v756
      %v758 = vperm.slane %v754, %v757
      %v759 = vrot.slane %v626, 4
      %v760 = vsel %vm329, %v759, %v622
      %v762 = vunpack.c.l.s4 1983009808
      %v763 = vunpack.c.0.s8 %v762
      %v764 = vperm.slane %v760, %v763
      %v765 = vrot.slane %v764, 4
      %v766 = vsel %vm329, %v765, %v758
      %v768 = vunpack.c.l.s4 1934713408
      %v769 = vunpack.c.0.s8 %v768
      %v770 = vperm.slane %v766, %v769
      %v773 = vpack.i.b16 %v662, %v644
      %v774 = vshrl.u32 %v644, 16
      %v775 = vshrl.u32 %v662, 16
      %v776 = vpack.i.b16 %v775, %v774
      %v779 = vpack.i.b16 %v698, %v680
      %v780 = vshrl.u32 %v680, 16
      %v781 = vshrl.u32 %v698, 16
      %v782 = vpack.i.b16 %v781, %v780
      %v785 = vpack.i.b16 %v734, %v716
      %v786 = vshrl.u32 %v716, 16
      %v787 = vshrl.u32 %v734, 16
      %v788 = vpack.i.b16 %v787, %v786
      %v791 = vpack.i.b16 %v770, %v752
      %v792 = vshrl.u32 %v752, 16
      %v793 = vshrl.u32 %v770, 16
      %v794 = vpack.i.b16 %v793, %v792
      %799 = vrot.lane.b32.xlu0 %v254, 112
      %v800 = vpop.permute.xlu0 %799
      %801 = vrot.lane.b32.xlu0 %v256, 112
      %v802 = vpop.permute.xlu0 %801
      %803 = vrot.lane.b32.xlu0 %v259, 112
      %v804 = vpop.permute.xlu0 %803
      %805 = vrot.lane.b32.xlu0 %v261, 112
      %v806 = vpop.permute.xlu0 %805
      %v811 = vrot.slane %v254, 4
      %v812 = vsel %vm268, 0.0, %v811
      %v814 = vunpack.c.l.s4 1983009808
      %v815 = vunpack.c.0.s8 %v814
      %v816 = vperm.slane %v254, %v815
      %v818 = vunpack.c.l.s4 1983009808
      %v819 = vunpack.c.0.s8 %v818
      %v820 = vperm.slane %v812, %v819
      %v821 = vrot.slane %v800, 4
      %v822 = vsel %vm268, 0.0, %v821
      %v824 = vunpack.c.l.s4 1983009808
      %v825 = vunpack.c.0.s8 %v824
      %v826 = vperm.slane %v800, %v825
      %v828 = vunpack.c.l.s4 1983009808
      %v829 = vunpack.c.0.s8 %v828
      %v830 = vperm.slane %v822, %v829
      %v831 = vrot.slane %v826, 4
      %v832 = vsel %vm268, %v831, %v816
      %v833 = vrot.slane %v816, 4
      %v834 = vsel %vm268, %v826, %v833
      %v836 = vunpack.c.l.s4 1934713408
      %v837 = vunpack.c.0.s8 %v836
      %v838 = vperm.slane %v832, %v837
      %v840 = vunpack.c.l.s4 1934713408
      %v841 = vunpack.c.0.s8 %v840
      %v842 = vperm.slane %v834, %v841
      %v843 = vrot.slane %v830, 4
      %v844 = vsel %vm268, %v843, %v820
      %v845 = vrot.slane %v820, 4
      %v846 = vsel %vm268, %v830, %v845
      %v848 = vunpack.c.l.s4 1934713408
      %v849 = vunpack.c.0.s8 %v848
      %v850 = vperm.slane %v844, %v849
      %v852 = vunpack.c.l.s4 1934713408
      %v853 = vunpack.c.0.s8 %v852
      %v854 = vperm.slane %v846, %v853
      %v855 = vrot.slane %v838, 4
      %v856 = vsel %vm268, 0.0, %v855
      %v857 = vrot.slane %v842, 4
      %v858 = vsel %vm268, 0.0, %v857
      %v859 = vrot.slane %v850, 4
      %v860 = vsel %vm268, 0.0, %v859
      %v861 = vrot.slane %v854, 4
      %v862 = vsel %vm268, 0.0, %v861
      %v863 = vrot.slane %v256, 4
      %v864 = vsel %vm268, 0.0, %v863
      %v866 = vunpack.c.l.s4 1983009808
      %v867 = vunpack.c.0.s8 %v866
      %v868 = vperm.slane %v256, %v867
      %v870 = vunpack.c.l.s4 1983009808
      %v871 = vunpack.c.0.s8 %v870
      %v872 = vperm.slane %v864, %v871
      %v873 = vrot.slane %v802, 4
      %v874 = vsel %vm268, 0.0, %v873
      %v876 = vunpack.c.l.s4 1983009808
      %v877 = vunpack.c.0.s8 %v876
      %v878 = vperm.slane %v802, %v877
      %v880 = vunpack.c.l.s4 1983009808
      %v881 = vunpack.c.0.s8 %v880
      %v882 = vperm.slane %v874, %v881
      %v883 = vrot.slane %v878, 4
      %v884 = vsel %vm268, %v883, %v868
      %v885 = vrot.slane %v868, 4
      %v886 = vsel %vm268, %v878, %v885
      %v888 = vunpack.c.l.s4 1934713408
      %v889 = vunpack.c.0.s8 %v888
      %v890 = vperm.slane %v884, %v889
      %v892 = vunpack.c.l.s4 1934713408
      %v893 = vunpack.c.0.s8 %v892
      %v894 = vperm.slane %v886, %v893
      %v895 = vrot.slane %v882, 4
      %v896 = vsel %vm268, %v895, %v872
      %v897 = vrot.slane %v872, 4
      %v898 = vsel %vm268, %v882, %v897
      %v900 = vunpack.c.l.s4 1934713408
      %v901 = vunpack.c.0.s8 %v900
      %v902 = vperm.slane %v896, %v901
      %v904 = vunpack.c.l.s4 1934713408
      %v905 = vunpack.c.0.s8 %v904
      %v906 = vperm.slane %v898, %v905
      %v907 = vrot.slane %v890, 4
      %v908 = vsel %vm268, 0.0, %v907
      %v909 = vrot.slane %v894, 4
      %v910 = vsel %vm268, 0.0, %v909
      %v911 = vrot.slane %v902, 4
      %v912 = vsel %vm268, 0.0, %v911
      %v913 = vrot.slane %v906, 4
      %v914 = vsel %vm268, 0.0, %v913
      %v915 = vrot.slane %v259, 4
      %v916 = vsel %vm268, 0.0, %v915
      %v918 = vunpack.c.l.s4 1983009808
      %v919 = vunpack.c.0.s8 %v918
      %v920 = vperm.slane %v259, %v919
      %v922 = vunpack.c.l.s4 1983009808
      %v923 = vunpack.c.0.s8 %v922
      %v924 = vperm.slane %v916, %v923
      %v925 = vrot.slane %v804, 4
      %v926 = vsel %vm268, 0.0, %v925
      %v928 = vunpack.c.l.s4 1983009808
      %v929 = vunpack.c.0.s8 %v928
      %v930 = vperm.slane %v804, %v929
      %v932 = vunpack.c.l.s4 1983009808
      %v933 = vunpack.c.0.s8 %v932
      %v934 = vperm.slane %v926, %v933
      %v935 = vrot.slane %v930, 4
      %v936 = vsel %vm268, %v935, %v920
      %v937 = vrot.slane %v920, 4
      %v938 = vsel %vm268, %v930, %v937
      %v940 = vunpack.c.l.s4 1934713408
      %v941 = vunpack.c.0.s8 %v940
      %v942 = vperm.slane %v936, %v941
      %v944 = vunpack.c.l.s4 1934713408
      %v945 = vunpack.c.0.s8 %v944
      %v946 = vperm.slane %v938, %v945
      %v947 = vrot.slane %v934, 4
      %v948 = vsel %vm268, %v947, %v924
      %v949 = vrot.slane %v924, 4
      %v950 = vsel %vm268, %v934, %v949
      %v952 = vunpack.c.l.s4 1934713408
      %v953 = vunpack.c.0.s8 %v952
      %v954 = vperm.slane %v948, %v953
      %v956 = vunpack.c.l.s4 1934713408
      %v957 = vunpack.c.0.s8 %v956
      %v958 = vperm.slane %v950, %v957
      %v959 = vrot.slane %v942, 4
      %v960 = vsel %vm268, 0.0, %v959
      %v961 = vrot.slane %v946, 4
      %v962 = vsel %vm268, 0.0, %v961
      %v963 = vrot.slane %v954, 4
      %v964 = vsel %vm268, 0.0, %v963
      %v965 = vrot.slane %v958, 4
      %v966 = vsel %vm268, 0.0, %v965
      %v967 = vrot.slane %v261, 4
      %v968 = vsel %vm268, 0.0, %v967
      %v970 = vunpack.c.l.s4 1983009808
      %v971 = vunpack.c.0.s8 %v970
      %v972 = vperm.slane %v261, %v971
      %v974 = vunpack.c.l.s4 1983009808
      %v975 = vunpack.c.0.s8 %v974
      %v976 = vperm.slane %v968, %v975
      %v977 = vrot.slane %v806, 4
      %v978 = vsel %vm268, 0.0, %v977
      %v980 = vunpack.c.l.s4 1983009808
      %v981 = vunpack.c.0.s8 %v980
      %v982 = vperm.slane %v806, %v981
      %v984 = vunpack.c.l.s4 1983009808
      %v985 = vunpack.c.0.s8 %v984
      %v986 = vperm.slane %v978, %v985
      %v987 = vrot.slane %v982, 4
      %v988 = vsel %vm268, %v987, %v972
      %v989 = vrot.slane %v972, 4
      %v990 = vsel %vm268, %v982, %v989
      %v992 = vunpack.c.l.s4 1934713408
      %v993 = vunpack.c.0.s8 %v992
      %v994 = vperm.slane %v988, %v993
      %v996 = vunpack.c.l.s4 1934713408
      %v997 = vunpack.c.0.s8 %v996
      %v998 = vperm.slane %v990, %v997
      %v999 = vrot.slane %v986, 4
      %v1000 = vsel %vm268, %v999, %v976
      %v1001 = vrot.slane %v976, 4
      %v1002 = vsel %vm268, %v986, %v1001
      %v1004 = vunpack.c.l.s4 1934713408
      %v1005 = vunpack.c.0.s8 %v1004
      %v1006 = vperm.slane %v1000, %v1005
      %v1008 = vunpack.c.l.s4 1934713408
      %v1009 = vunpack.c.0.s8 %v1008
      %v1010 = vperm.slane %v1002, %v1009
      %v1011 = vrot.slane %v994, 4
      %v1012 = vsel %vm268, 0.0, %v1011
      %v1013 = vrot.slane %v998, 4
      %v1014 = vsel %vm268, 0.0, %v1013
      %v1015 = vrot.slane %v1006, 4
      %v1016 = vsel %vm268, 0.0, %v1015
      %v1017 = vrot.slane %v1010, 4
      %v1018 = vsel %vm268, 0.0, %v1017
      %v1019 = vpack.c.bf16 %v838, %v838
      %v1020 = vpack.c.bf16 %v856, %v856
      %v1021 = vpack.c.bf16 %v842, %v842
      %v1022 = vpack.c.bf16 %v858, %v858
      %v1023 = vpack.c.bf16 %v850, %v850
      %v1024 = vpack.c.bf16 %v860, %v860
      %v1025 = vpack.c.bf16 %v854, %v854
      %v1026 = vpack.c.bf16 %v862, %v862
      %v1027 = vpack.c.bf16 %v890, %v890
      %v1028 = vpack.c.bf16 %v908, %v908
      %v1029 = vpack.c.bf16 %v894, %v894
      %v1030 = vpack.c.bf16 %v910, %v910
      %v1031 = vpack.c.bf16 %v902, %v902
      %v1032 = vpack.c.bf16 %v912, %v912
      %v1033 = vpack.c.bf16 %v906, %v906
      %v1034 = vpack.c.bf16 %v914, %v914
      %v1035 = vpack.c.bf16 %v942, %v942
      %v1036 = vpack.c.bf16 %v960, %v960
      %v1037 = vpack.c.bf16 %v946, %v946
      %v1038 = vpack.c.bf16 %v962, %v962
      %v1039 = vpack.c.bf16 %v954, %v954
      %v1040 = vpack.c.bf16 %v964, %v964
      %v1041 = vpack.c.bf16 %v958, %v958
      %v1042 = vpack.c.bf16 %v966, %v966
      %v1043 = vpack.c.bf16 %v994, %v994
      %v1044 = vpack.c.bf16 %v1012, %v1012
      %v1045 = vpack.c.bf16 %v998, %v998
      %v1046 = vpack.c.bf16 %v1014, %v1014
      %v1047 = vpack.c.bf16 %v1006, %v1006
      %v1048 = vpack.c.bf16 %v1016, %v1016
      %v1049 = vpack.c.bf16 %v1010, %v1010
      %v1050 = vpack.c.bf16 %v1018, %v1018
      %v1051 = vrot.slane %v1023, 4
      %v1052 = vsel %vm329, %v1051, %v1019
      %v1054 = vunpack.c.l.s4 1983009808
      %v1055 = vunpack.c.0.s8 %v1054
      %v1056 = vperm.slane %v1052, %v1055
      %v1057 = vrot.slane %v1025, 4
      %v1058 = vsel %vm329, %v1057, %v1021
      %v1060 = vunpack.c.l.s4 1983009808
      %v1061 = vunpack.c.0.s8 %v1060
      %v1062 = vperm.slane %v1058, %v1061
      %v1063 = vrot.slane %v1062, 4
      %v1064 = vsel %vm329, %v1063, %v1056
      %v1066 = vunpack.c.l.s4 1934713408
      %v1067 = vunpack.c.0.s8 %v1066
      %v1068 = vperm.slane %v1064, %v1067
      %v1069 = vrot.slane %v1024, 4
      %v1070 = vsel %vm329, %v1069, %v1020
      %v1072 = vunpack.c.l.s4 1983009808
      %v1073 = vunpack.c.0.s8 %v1072
      %v1074 = vperm.slane %v1070, %v1073
      %v1075 = vrot.slane %v1026, 4
      %v1076 = vsel %vm329, %v1075, %v1022
      %v1078 = vunpack.c.l.s4 1983009808
      %v1079 = vunpack.c.0.s8 %v1078
      %v1080 = vperm.slane %v1076, %v1079
      %v1081 = vrot.slane %v1080, 4
      %v1082 = vsel %vm329, %v1081, %v1074
      %v1084 = vunpack.c.l.s4 1934713408
      %v1085 = vunpack.c.0.s8 %v1084
      %v1086 = vperm.slane %v1082, %v1085
      %v1087 = vrot.slane %v1031, 4
      %v1088 = vsel %vm329, %v1087, %v1027
      %v1090 = vunpack.c.l.s4 1983009808
      %v1091 = vunpack.c.0.s8 %v1090
      %v1092 = vperm.slane %v1088, %v1091
      %v1093 = vrot.slane %v1033, 4
      %v1094 = vsel %vm329, %v1093, %v1029
      %v1096 = vunpack.c.l.s4 1983009808
      %v1097 = vunpack.c.0.s8 %v1096
      %v1098 = vperm.slane %v1094, %v1097
      %v1099 = vrot.slane %v1098, 4
      %v1100 = vsel %vm329, %v1099, %v1092
      %v1102 = vunpack.c.l.s4 1934713408
      %v1103 = vunpack.c.0.s8 %v1102
      %v1104 = vperm.slane %v1100, %v1103
      %v1105 = vrot.slane %v1032, 4
      %v1106 = vsel %vm329, %v1105, %v1028
      %v1108 = vunpack.c.l.s4 1983009808
      %v1109 = vunpack.c.0.s8 %v1108
      %v1110 = vperm.slane %v1106, %v1109
      %v1111 = vrot.slane %v1034, 4
      %v1112 = vsel %vm329, %v1111, %v1030
      %v1114 = vunpack.c.l.s4 1983009808
      %v1115 = vunpack.c.0.s8 %v1114
      %v1116 = vperm.slane %v1112, %v1115
      %v1117 = vrot.slane %v1116, 4
      %v1118 = vsel %vm329, %v1117, %v1110
      %v1120 = vunpack.c.l.s4 1934713408
      %v1121 = vunpack.c.0.s8 %v1120
      %v1122 = vperm.slane %v1118, %v1121
      %v1123 = vrot.slane %v1039, 4
      %v1124 = vsel %vm329, %v1123, %v1035
      %v1126 = vunpack.c.l.s4 1983009808
      %v1127 = vunpack.c.0.s8 %v1126
      %v1128 = vperm.slane %v1124, %v1127
      %v1129 = vrot.slane %v1041, 4
      %v1130 = vsel %vm329, %v1129, %v1037
      %v1132 = vunpack.c.l.s4 1983009808
      %v1133 = vunpack.c.0.s8 %v1132
      %v1134 = vperm.slane %v1130, %v1133
      %v1135 = vrot.slane %v1134, 4
      %v1136 = vsel %vm329, %v1135, %v1128
      %v1138 = vunpack.c.l.s4 1934713408
      %v1139 = vunpack.c.0.s8 %v1138
      %v1140 = vperm.slane %v1136, %v1139
      %v1141 = vrot.slane %v1040, 4
      %v1142 = vsel %vm329, %v1141, %v1036
      %v1144 = vunpack.c.l.s4 1983009808
      %v1145 = vunpack.c.0.s8 %v1144
      %v1146 = vperm.slane %v1142, %v1145
      %v1147 = vrot.slane %v1042, 4
      %v1148 = vsel %vm329, %v1147, %v1038
      %v1150 = vunpack.c.l.s4 1983009808
      %v1151 = vunpack.c.0.s8 %v1150
      %v1152 = vperm.slane %v1148, %v1151
      %v1153 = vrot.slane %v1152, 4
      %v1154 = vsel %vm329, %v1153, %v1146
      %v1156 = vunpack.c.l.s4 1934713408
      %v1157 = vunpack.c.0.s8 %v1156
      %v1158 = vperm.slane %v1154, %v1157
      %v1159 = vrot.slane %v1047, 4
      %v1160 = vsel %vm329, %v1159, %v1043
      %v1162 = vunpack.c.l.s4 1983009808
      %v1163 = vunpack.c.0.s8 %v1162
      %v1164 = vperm.slane %v1160, %v1163
      %v1165 = vrot.slane %v1049, 4
      %v1166 = vsel %vm329, %v1165, %v1045
      %v1168 = vunpack.c.l.s4 1983009808
      %v1169 = vunpack.c.0.s8 %v1168
      %v1170 = vperm.slane %v1166, %v1169
      %v1171 = vrot.slane %v1170, 4
      %v1172 = vsel %vm329, %v1171, %v1164
      %v1174 = vunpack.c.l.s4 1934713408
      %v1175 = vunpack.c.0.s8 %v1174
      %v1176 = vperm.slane %v1172, %v1175
      %v1177 = vrot.slane %v1048, 4
      %v1178 = vsel %vm329, %v1177, %v1044
      %v1180 = vunpack.c.l.s4 1983009808
      %v1181 = vunpack.c.0.s8 %v1180
      %v1182 = vperm.slane %v1178, %v1181
      %v1183 = vrot.slane %v1050, 4
      %v1184 = vsel %vm329, %v1183, %v1046
      %v1186 = vunpack.c.l.s4 1983009808
      %v1187 = vunpack.c.0.s8 %v1186
      %v1188 = vperm.slane %v1184, %v1187
      %v1189 = vrot.slane %v1188, 4
      %v1190 = vsel %vm329, %v1189, %v1182
      %v1192 = vunpack.c.l.s4 1934713408
      %v1193 = vunpack.c.0.s8 %v1192
      %v1194 = vperm.slane %v1190, %v1193
      %v1197 = vpack.i.b16 %v1086, %v1068
      %v1198 = vshrl.u32 %v1068, 16
      %v1199 = vshrl.u32 %v1086, 16
      %v1200 = vpack.i.b16 %v1199, %v1198
      %v1203 = vpack.i.b16 %v1122, %v1104
      %v1204 = vshrl.u32 %v1104, 16
      %v1205 = vshrl.u32 %v1122, 16
      %v1206 = vpack.i.b16 %v1205, %v1204
      %v1209 = vpack.i.b16 %v1158, %v1140
      %v1210 = vshrl.u32 %v1140, 16
      %v1211 = vshrl.u32 %v1158, 16
      %v1212 = vpack.i.b16 %v1211, %v1210
      %v1215 = vpack.i.b16 %v1194, %v1176
      %v1216 = vshrl.u32 %v1176, 16
      %v1217 = vshrl.u32 %v1194, 16
      %v1218 = vpack.i.b16 %v1217, %v1216
      %s1219 = sld [smem:[#allocation5]]
      %v1220 = vlaneseq
      %v1221 = vand.u32 %v1220, 127
      %v1222 = vstv %s1219
      %vm1223 = vcmp.lt.s32.totalorder %v1221, %v1222
      %v1224 = vsel %vm1223, 0.0, -1e+30
      %v1225 = vunpack.c.l.b16 %v773
      %v1226 = vunpack.c.l.b16 %v779
      %v1227 = vunpack.c.l.b16 %v785
      %v1228 = vunpack.c.l.b16 %v791
      %v1229 = vpack.c.b16 %v1226, %v1225
      %v1230 = vpack.c.b16 %v1228, %v1227
      %vm1231 = vcmask 130048
      %v1233 = vsel %vm1231, %v367, 0
      %v1236 = vsel %vm1231, %v1229, 0
      %v1239 = vsel %vm1231, %v1230, 0
      %1241 = vmatpush.bf16.xpose.msra.mxu0 0
      %1242 = vmatpush.bf16.xpose.msra.mxu0 0
      %1243 = vmatpush.bf16.xpose.msra.mxu0 0
      %1244 = vmatpush.bf16.xpose.msra.mxu0 0
      %1245 = vmatpush.bf16.xpose.msra.mxu0 0
      %1246 = vmatpush.bf16.xpose.msra.mxu0 0
      %1247 = vmatpush.bf16.xpose.msra.mxu0 %v1239
      %1248 = vmatpush.bf16.xpose.msra.mxu0 %v1236
      %1249 = vmatmul.bf16.gmra.mxu0 %v1233
      %v1250 = vpop.f32.mrf.mxu0
      %v1251 = vadd.f32 %v1224, %v1250
      %v1252 = vpop.f32.mrf.mxu0
      %1253 = vdwg.mxu0
      %v1254 = vunpack.c.l.b16 %v776
      %v1255 = vunpack.c.l.b16 %v782
      %v1256 = vunpack.c.l.b16 %v788
      %v1257 = vunpack.c.l.b16 %v794
      %v1258 = vpack.c.b16 %v1255, %v1254
      %v1259 = vpack.c.b16 %v1257, %v1256
      %v1261 = vsel %vm1231, %v370, 0
      %v1264 = vsel %vm1231, %v1258, 0
      %v1267 = vsel %vm1231, %v1259, 0
      %1269 = vmatpush.bf16.xpose.msra.mxu0 0
      %1270 = vmatpush.bf16.xpose.msra.mxu0 0
      %1271 = vmatpush.bf16.xpose.msra.mxu0 0
      %1272 = vmatpush.bf16.xpose.msra.mxu0 0
      %1273 = vmatpush.bf16.xpose.msra.mxu0 0
      %1274 = vmatpush.bf16.xpose.msra.mxu0 0
      %1275 = vmatpush.bf16.xpose.msra.mxu0 %v1267
      %1276 = vmatpush.bf16.xpose.msra.mxu0 %v1264
      %1277 = vmatmul.bf16.gmra.mxu0 %v1261
      %v1278 = vpop.f32.mrf.mxu0
      %v1279 = vadd.f32 %v1224, %v1278
      %v1280 = vpop.f32.mrf.mxu0
      %1281 = vdwg.mxu0
      %v1282 = vsel %vm152, %v1251, -inf
      %1283 = vmax.xlane.f32.xlu0 %v1282
      %v1284 = vpop.xlane.xlu0 %1283
      %v1285 = vsel %vm152, %v1279, -inf
      %1286 = vmax.xlane.f32.xlu0 %v1285
      %v1287 = vpop.xlane.xlu0 %1286
      %v1288 = vsub.f32 %v1251, %v1284
      %v1289 = vsub.f32 %v1279, %v1287
      %v1290 = vmul.f32 %v1288, 1.442695
      %v1291 = vpow.pop %v1290
      %v1292 = vmul.f32 %v1289, 1.442695
      %v1293 = vpow.pop %v1292
      %v1294 = vsel %vm152, %v1291, 0.0
      %1295 = vadd.xlane.f32.xlu0 %v1294
      %v1296 = vpop.xlane.xlu0 %1295
      %v1297 = vsel %vm152, %v1293, 0.0
      %1298 = vadd.xlane.f32.xlu0 %v1297
      %v1299 = vpop.xlane.xlu0 %1298
      %v1300 = vrcp.pop %v1296
      %v1301 = vmul.f32 %v1296, %v1300
      %v1302 = vsub.f32 1.0, %v1301
      %v1303 = vmul.f32 %v1300, %v1302
      %v1304 = vadd.f32 %v1300, %v1303
      %vm1305 = vweird.f32 %v1296
      %vm1306 = vweird.f32 %v1300
      %vm1307 = vmor %vm1305, %vm1306
      %v1308 = vsel %vm1307, %v1300, %v1304
      %v1309 = vand.u32 2147483647, %v1296
      %vm1310 = vcmp.eq.f32.partialorder %v1309, 8.507059e+37
      %v1311 = vand.u32 %v1296, 2147483648
      %v1312 = vor.u32 1.1754944e-38, %v1311
      %v1313 = vsel %vm1310, %v1312, %v1308
      %v1314 = vrcp.pop %v1299
      %v1315 = vmul.f32 %v1299, %v1314
      %v1316 = vsub.f32 1.0, %v1315
      %v1317 = vmul.f32 %v1314, %v1316
      %v1318 = vadd.f32 %v1314, %v1317
      %vm1319 = vweird.f32 %v1299
      %vm1320 = vweird.f32 %v1314
      %vm1321 = vmor %vm1319, %vm1320
      %v1322 = vsel %vm1321, %v1314, %v1318
      %v1323 = vand.u32 2147483647, %v1299
      %vm1324 = vcmp.eq.f32.partialorder %v1323, 8.507059e+37
      %v1325 = vand.u32 %v1299, 2147483648
      %v1326 = vor.u32 1.1754944e-38, %v1325
      %v1327 = vsel %vm1324, %v1326, %v1322
      %v1328 = vmul.f32 %v1291, %v1313
      %v1329 = vmul.f32 %v1293, %v1327
      %v1330 = vpack.c.bf16 %v1328, %v1328
      %v1331 = vpack.c.bf16 %v1329, %v1329
      %v1332 = vunpack.c.l.b16 %v1197
      %v1333 = vunpack.c.l.b16 %v1203
      %v1334 = vunpack.c.l.b16 %v1209
      %v1335 = vunpack.c.l.b16 %v1215
      %v1336 = vpack.c.b16 %v1333, %v1332
      %v1337 = vpack.c.b16 %v1335, %v1334
      %v1341 = vsel %vm152, %v1330, 0
      %1343 = vmatpush.bf16.msra.mxu0 0
      %1344 = vmatpush.bf16.msra.mxu0 0
      %1345 = vmatpush.bf16.msra.mxu0 0
      %1346 = vmatpush.bf16.msra.mxu0 0
      %1347 = vmatpush.bf16.msra.mxu0 0
      %1348 = vmatpush.bf16.msra.mxu0 0
      %1349 = vmatpush.bf16.msra.mxu0 %v1337
      %1350 = vmatpush.bf16.msra.mxu0 %v1336
      %1351 = vmatmul.bf16.gmra.mxu0 %v1341
      %v1352 = vpop.f32.mrf.mxu0
      %v1353 = vadd.f32 0.0, %v1352
      %v1354 = vpop.f32.mrf.mxu0
      %1355 = vdwg.mxu0
      %v1356 = vunpack.c.l.b16 %v1200
      %v1357 = vunpack.c.l.b16 %v1206
      %v1358 = vunpack.c.l.b16 %v1212
      %v1359 = vunpack.c.l.b16 %v1218
      %v1360 = vpack.c.b16 %v1357, %v1356
      %v1361 = vpack.c.b16 %v1359, %v1358
      %v1365 = vsel %vm152, %v1331, 0
      %1367 = vmatpush.bf16.msra.mxu0 0
      %1368 = vmatpush.bf16.msra.mxu0 0
      %1369 = vmatpush.bf16.msra.mxu0 0
      %1370 = vmatpush.bf16.msra.mxu0 0
      %1371 = vmatpush.bf16.msra.mxu0 0
      %1372 = vmatpush.bf16.msra.mxu0 0
      %1373 = vmatpush.bf16.msra.mxu0 %v1361
      %1374 = vmatpush.bf16.msra.mxu0 %v1360
      %1375 = vmatmul.bf16.gmra.mxu0 %v1365
      %v1376 = vpop.f32.mrf.mxu0
      %v1377 = vadd.f32 0.0, %v1376
      %v1378 = vpop.f32.mrf.mxu0
      %1379 = vdwg.mxu0
      %v1380 = vrot.slane %v1353, 4
      %v1381 = vsel %vm268, 0.0, %v1380
      %v1383 = vunpack.c.l.s4 1983009808
      %v1384 = vunpack.c.0.s8 %v1383
      %v1385 = vperm.slane %v1353, %v1384
      %v1387 = vunpack.c.l.s4 1983009808
      %v1388 = vunpack.c.0.s8 %v1387
      %v1389 = vperm.slane %v1381, %v1388
      %v1390 = vrot.slane %v1377, 4
      %v1391 = vsel %vm268, 0.0, %v1390
      %v1393 = vunpack.c.l.s4 1983009808
      %v1394 = vunpack.c.0.s8 %v1393
      %v1395 = vperm.slane %v1377, %v1394
      %v1397 = vunpack.c.l.s4 1983009808
      %v1398 = vunpack.c.0.s8 %v1397
      %v1399 = vperm.slane %v1391, %v1398
      %v1400 = vrot.slane %v1395, 4
      %v1401 = vsel %vm268, %v1400, %v1385
      %v1402 = vrot.slane %v1385, 4
      %v1403 = vsel %vm268, %v1395, %v1402
      %v1405 = vunpack.c.l.s4 1934713408
      %v1406 = vunpack.c.0.s8 %v1405
      %v1407 = vperm.slane %v1401, %v1406
      %v1409 = vunpack.c.l.s4 1934713408
      %v1410 = vunpack.c.0.s8 %v1409
      %v1411 = vperm.slane %v1403, %v1410
      %v1412 = vrot.slane %v1399, 4
      %v1413 = vsel %vm268, %v1412, %v1389
      %v1414 = vrot.slane %v1389, 4
      %v1415 = vsel %vm268, %v1399, %v1414
      %v1417 = vunpack.c.l.s4 1934713408
      %v1418 = vunpack.c.0.s8 %v1417
      %v1419 = vperm.slane %v1413, %v1418
      %v1421 = vunpack.c.l.s4 1934713408
      %v1422 = vunpack.c.0.s8 %v1421
      %v1423 = vperm.slane %v1415, %v1422
      %v1424 = vrot.slane %v1407, 4
      %v1425 = vsel %vm268, 0.0, %v1424
      %v1426 = vrot.slane %v1411, 4
      %v1427 = vsel %vm268, 0.0, %v1426
      %v1428 = vrot.slane %v1419, 4
      %v1429 = vsel %vm268, 0.0, %v1428
      %v1430 = vrot.slane %v1423, 4
      %v1431 = vsel %vm268, 0.0, %v1430
      %v1432 = vsel %vm268, %v1426, %v1407
      %v1434 = vunpack.c.l.s4 1983009808
      %v1435 = vunpack.c.0.s8 %v1434
      %v1436 = vperm.slane %v1432, %v1435
      %v1437 = vrot.slane %v1427, 4
      %v1438 = vsel %vm268, %v1437, %v1425
      %v1440 = vunpack.c.l.s4 1983009808
      %v1441 = vunpack.c.0.s8 %v1440
      %v1442 = vperm.slane %v1438, %v1441
      %v1443 = vsel %vm268, %v1430, %v1419
      %v1445 = vunpack.c.l.s4 1983009808
      %v1446 = vunpack.c.0.s8 %v1445
      %v1447 = vperm.slane %v1443, %v1446
      %v1448 = vrot.slane %v1431, 4
      %v1449 = vsel %vm268, %v1448, %v1429
      %v1451 = vunpack.c.l.s4 1983009808
      %v1452 = vunpack.c.0.s8 %v1451
      %v1453 = vperm.slane %v1449, %v1452
      %v1454 = vrot.slane %v1442, 4
      %v1455 = vsel %vm268, %v1454, %v1436
      %v1457 = vunpack.c.l.s4 1934713408
      %v1458 = vunpack.c.0.s8 %v1457
      %v1459 = vperm.slane %v1455, %v1458
      %v1460 = vrot.slane %v1453, 4
      %v1461 = vsel %vm268, %v1460, %v1447
      %v1463 = vunpack.c.l.s4 1934713408
      %v1464 = vunpack.c.0.s8 %v1463
      %v1465 = vperm.slane %v1461, %v1464
      %v1466 = vrot.slane %v1465, 4
      %v1467 = vsel %vm268, %v1466, %v1459
      %v1468 = vrot.slane %v1459, 4
      %v1469 = vsel %vm268, %v1465, %v1468
      %1471 = vrot.lane.b32.xlu0 %v1469, 16
      %v1472 = vpop.permute.xlu0 %1471
      %v1474 = vsel %vm1231, %v1467, %v1472
      %v1475 = vpack.c.bf16 %v1474, %v1474
      %v1476 = vld [vmem:[%s9] sm:$0xf]
      %v1477 = vld [vmem:[%s9 + $0x4] sm:$0xf]
      %v1478 = vld [vmem:[%s9 + $0x8] sm:$0xf]
      %v1479 = vld [vmem:[%s9 + $0xc] sm:$0xf]
      %v1480 = vld [vmem:[%s10] sm:$0x1]
      %v1482 = vperm.slane %v1480, 0
      %v1488 = vunpack.c.l.b16 %v1476
      %v1489 = vunpack.c.l.b16 %v1477
      %v1490 = vunpack.c.l.b16 %v1478
      %v1491 = vunpack.c.l.b16 %v1479
      %v1492 = vpack.c.b16 %v1489, %v1488
      %v1493 = vpack.c.b16 %v1491, %v1490
      %v1497 = vsel %vm152, %v1475, 0
      %1499 = vmatpush.bf16.msra.mxu0 0
      %1500 = vmatpush.bf16.msra.mxu0 0
      %1501 = vmatpush.bf16.msra.mxu0 0
      %1502 = vmatpush.bf16.msra.mxu0 0
      %1503 = vmatpush.bf16.msra.mxu0 0
      %1504 = vmatpush.bf16.msra.mxu0 0
      %1505 = vmatpush.bf16.msra.mxu0 %v1493
      %1506 = vmatpush.bf16.msra.mxu0 %v1492
      %1507 = vmatmul.bf16.gmra.mxu0 %v1497
      %v1508 = vpop.f32.mrf.mxu0
      %v1509 = vadd.f32 %v1482, %v1508
      %v1510 = vpop.f32.mrf.mxu0
      %1511 = vdwg.mxu0
      %v1512 = vadd.f32 %v126, %v1509
      %v1513 = vld [vmem:[%s11] sm:$0x1]
      %v1514 = vld [vmem:[%s12] sm:$0x1]
      %v1515 = vsel %vm152, %v1512, 0.0
      %1516 = vadd.xlane.f32.xlu0 %v1515
      %v1517 = vpop.xlane.xlu0 %1516
      %v1518 = vrcp.pop 32.0
      %v1519 = vmul.f32 32.0, %v1518
      %v1520 = vsub.f32 1.0, %v1519
      %v1521 = vmul.f32 %v1518, %v1520
      %v1522 = vadd.f32 %v1518, %v1521
      %vm1523 = vweird.f32 %v1518
      %v1524 = vsel %vm1523, %v1518, %v1522
      %v1525 = vmul.f32 %v1517, %v1524
      %v1526 = vsub.f32 %v1512, %v1525
      %v1527 = vmul.f32 %v1526, %v1526
      %v1528 = vsel %vm152, %v1527, 0.0
      %1529 = vadd.xlane.f32.xlu0 %v1528
      %v1530 = vpop.xlane.xlu0 %1529
      %v1531 = vmul.f32 %v1530, %v1524
      %v1532 = vadd.f32 %v1531, 1e-05
      %v1533 = vrsqrt.pop %v1532
      %v1534 = vmul.f32 %v1533, %v1532
      %v1535 = vmul.f32 %v1534, %v1533
      %v1536 = vmul.f32 0.5, %v1535
      %v1537 = vsub.f32 1.5, %v1536
      %v1538 = vmul.f32 %v1533, %v1537
      %vm1539 = vweird.f32 %v1532
      %vm1540 = vweird.f32 %v1533
      %vm1541 = vmor %vm1539, %vm1540
      %v1542 = vsel %vm1541, %v1533, %v1538
      %v1543 = vmul.f32 %v1526, %v1542
      %v1545 = vperm.slane %v1513, 0
      %v1547 = vmul.f32 %v1543, %v1545
      %v1549 = vperm.slane %v1514, 0
      %v1551 = vadd.f32 %v1547, %v1549
      %1552 = vst.msk [vmem:[#allocation2] sm:$0xff] %vm152, %v1551
      %1553 = vst.msk [vmem:[#allocation3] sm:$0xff] %vm152, 0.0
      %v1554 = vsel %vm152, %v1328, 0.0
      %v1555 = vsel %vm152, %v1329, 0.0
      %v1556 = vadd.f32 %v1554, %v1555
      %v1557 = vmul.f32 %v1556, 0.5
      %v1558 = vadd.f32 %v1557, 1e-10
      %v1559 = vlog2.pop %v1558
      %v1560 = vmul.f32 %v1559, 0.6931472
      %v1561 = vmul.f32 %v1557, %v1560
      %v1562 = vsel %vm152, %v1561, 0.0
      %1563 = vadd.xlane.f32.xlu0 %v1562
      %v1564 = vpop.xlane.xlu0 %1563
      %v1565 = vsub.f32 0.0, %v1564
      %v1567 = vperm.slane %v1565, %v1221
      %vm1569 = vcmask 64512
      %v1570 = vsel %vm1569, %v1567, 0.0
      %1571 = vst [vmem:[%s20] sm:$0x1] %v1570
    $region93: #{_layer_forward.1} parent=1 // pred_fallthru
      _
    %v1572 = vld [vmem:[#allocation2] sm:$0xff]
    %v1573 = vpack.c.bf16 %v1572, %v1572
    %v1574 = vld [vmem:[#allocation9] sm:$0xf]
    %v1575 = vld [vmem:[#allocation9 + $0x4] sm:$0xf]
    %v1576 = vld [vmem:[#allocation9 + $0x8] sm:$0xf]
    %v1577 = vld [vmem:[#allocation9 + $0xc] sm:$0xf]
    %v1578 = vld [vmem:[#allocation11] sm:$0x1]
    %v1580 = vperm.slane %v1578, 0
    %v1586 = vunpack.c.l.b16 %v1574
    %v1587 = vunpack.c.l.b16 %v1575
    %v1588 = vunpack.c.l.b16 %v1576
    %v1589 = vunpack.c.l.b16 %v1577
    %v1590 = vpack.c.b16 %v1587, %v1586
    %v1591 = vpack.c.b16 %v1589, %v1588
    %vm1594 = vcmask 261120
    %v1596 = vsel %vm1594, %v1573, 0
    %1598 = vmatpush.bf16.msra.mxu0 0
    %1599 = vmatpush.bf16.msra.mxu0 0
    %1600 = vmatpush.bf16.msra.mxu0 0
    %1601 = vmatpush.bf16.msra.mxu0 0
    %1602 = vmatpush.bf16.msra.mxu0 0
    %1603 = vmatpush.bf16.msra.mxu0 0
    %1604 = vmatpush.bf16.msra.mxu0 %v1591
    %1605 = vmatpush.bf16.msra.mxu0 %v1590
    %1606 = vmatmul.bf16.gmra.mxu0 %v1596
    %v1607 = vpop.f32.mrf.mxu0
    %v1608 = vadd.f32 %v1580, %v1607
    %v1609 = vpop.f32.mrf.mxu0
    %1610 = vdwg.mxu0
    %v1611 = vmax.f32 %v1608, 0.0
    %v1612 = vld [vmem:[#allocation3] sm:$0xff]
    %v1613 = vpack.c.bf16 %v1611, %v1611
    %v1614 = vld [vmem:[%s15] sm:$0xf]
    %v1615 = vld [vmem:[%s15 + $0x4] sm:$0xf]
    %v1616 = vld [vmem:[%s15 + $0x8] sm:$0xf]
    %v1617 = vld [vmem:[%s15 + $0xc] sm:$0xf]
    %v1618 = vld [vmem:[%s15 + $0x10] sm:$0xf]
    %v1619 = vld [vmem:[%s15 + $0x14] sm:$0xf]
    %v1620 = vld [vmem:[%s15 + $0x18] sm:$0xf]
    %v1621 = vld [vmem:[%s15 + $0x1c] sm:$0xf]
    %v1622 = vld [vmem:[%s15 + $0x20] sm:$0xf]
    %v1623 = vld [vmem:[%s15 + $0x24] sm:$0xf]
    %v1624 = vld [vmem:[%s15 + $0x28] sm:$0xf]
    %v1625 = vld [vmem:[%s15 + $0x2c] sm:$0xf]
    %v1626 = vld [vmem:[%s15 + $0x30] sm:$0xf]
    %v1627 = vld [vmem:[%s15 + $0x34] sm:$0xf]
    %v1628 = vld [vmem:[%s15 + $0x38] sm:$0xf]
    %v1629 = vld [vmem:[%s15 + $0x3c] sm:$0xf]
    %v1646 = vunpack.c.l.b16 %v1614
    %v1647 = vunpack.c.l.b16 %v1615
    %v1648 = vunpack.c.l.b16 %v1616
    %v1649 = vunpack.c.l.b16 %v1617
    %v1650 = vunpack.c.l.b16 %v1618
    %v1651 = vunpack.c.l.b16 %v1619
    %v1652 = vunpack.c.l.b16 %v1620
    %v1653 = vunpack.c.l.b16 %v1621
    %v1654 = vunpack.c.l.b16 %v1622
    %v1655 = vunpack.c.l.b16 %v1623
    %v1656 = vunpack.c.l.b16 %v1624
    %v1657 = vunpack.c.l.b16 %v1625
    %v1658 = vunpack.c.l.b16 %v1626
    %v1659 = vunpack.c.l.b16 %v1627
    %v1660 = vunpack.c.l.b16 %v1628
    %v1661 = vunpack.c.l.b16 %v1629
    %v1662 = vpack.c.b16 %v1647, %v1646
    %v1663 = vpack.c.b16 %v1649, %v1648
    %v1664 = vpack.c.b16 %v1651, %v1650
    %v1665 = vpack.c.b16 %v1653, %v1652
    %v1666 = vpack.c.b16 %v1655, %v1654
    %v1667 = vpack.c.b16 %v1657, %v1656
    %v1668 = vpack.c.b16 %v1659, %v1658
    %v1669 = vpack.c.b16 %v1661, %v1660
    %1678 = vmatpush.bf16.msra.mxu0 %v1669
    %1679 = vmatpush.bf16.msra.mxu0 %v1668
    %1680 = vmatpush.bf16.msra.mxu0 %v1667
    %1681 = vmatpush.bf16.msra.mxu0 %v1666
    %1682 = vmatpush.bf16.msra.mxu0 %v1665
    %1683 = vmatpush.bf16.msra.mxu0 %v1664
    %1684 = vmatpush.bf16.msra.mxu0 %v1663
    %1685 = vmatpush.bf16.msra.mxu0 %v1662
    %1686 = vmatmul.bf16.gmra.mxu0 %v1613
    %v1687 = vpop.f32.mrf.mxu0
    %v1688 = vadd.f32 0.0, %v1687
    %v1689 = vpop.f32.mrf.mxu0
    %1690 = vdwg.mxu0
    %v1691 = vadd.f32 %v1612, %v1688
    %1692 = vst.msk [vmem:[#allocation3] sm:$0xff] %vm1594, %v1691
    // Predicated region
    $region94: #{_layer_forward.1} parent=1 // pred_check
      %p1693 = pneg %p122
    $region95: #{_layer_forward.1} parent=1 // pred_check_branch
      %1695 = sbr.rel (%p1693) target = $region97
    $region96: #{_layer_forward.1} parent=1 // pred_region
      %v1696 = vld [vmem:[#allocation3] sm:$0xff]
      %v1697 = vld [vmem:[#allocation12] sm:$0x1]
      %v1699 = vperm.slane %v1697, 0
      %v1701 = vadd.f32 %v1696, %v1699
      %v1702 = vld [vmem:[#allocation2] sm:$0xff]
      %v1703 = vadd.f32 %v1702, %v1701
      %v1704 = vld [vmem:[%s17] sm:$0x1]
      %v1705 = vld [vmem:[%s18] sm:$0x1]
      %v1706 = vsel %vm1594, %v1703, 0.0
      %1707 = vadd.xlane.f32.xlu0 %v1706
      %v1708 = vpop.xlane.xlu0 %1707
      %v1709 = vrcp.pop 32.0
      %v1710 = vmul.f32 32.0, %v1709
      %v1711 = vsub.f32 1.0, %v1710
      %v1712 = vmul.f32 %v1709, %v1711
      %v1713 = vadd.f32 %v1709, %v1712
      %vm1714 = vweird.f32 %v1709
      %v1715 = vsel %vm1714, %v1709, %v1713
      %v1716 = vmul.f32 %v1708, %v1715
      %v1717 = vsub.f32 %v1703, %v1716
      %v1718 = vmul.f32 %v1717, %v1717
      %v1719 = vsel %vm1594, %v1718, 0.0
      %1720 = vadd.xlane.f32.xlu0 %v1719
      %v1721 = vpop.xlane.xlu0 %1720
      %v1722 = vmul.f32 %v1721, %v1715
      %v1723 = vadd.f32 %v1722, 1e-05
      %v1724 = vrsqrt.pop %v1723
      %v1725 = vmul.f32 %v1724, %v1723
      %v1726 = vmul.f32 %v1725, %v1724
      %v1727 = vmul.f32 0.5, %v1726
      %v1728 = vsub.f32 1.5, %v1727
      %v1729 = vmul.f32 %v1724, %v1728
      %vm1730 = vweird.f32 %v1723
      %vm1731 = vweird.f32 %v1724
      %vm1732 = vmor %vm1730, %vm1731
      %v1733 = vsel %vm1732, %v1724, %v1729
      %v1734 = vmul.f32 %v1717, %v1733
      %v1736 = vperm.slane %v1704, 0
      %v1738 = vmul.f32 %v1734, %v1736
      %v1740 = vperm.slane %v1705, 0
      %v1742 = vadd.f32 %v1738, %v1740
      %1743 = vst.msk [vmem:[#allocation14] sm:$0xff] %vm1594, %v1742
    $region97: #{_layer_forward.1} parent=1 // pred_fallthru
      _
    // Predicated region
    $region98: #{_layer_forward.1} parent=1 // pred_check
      _
    $region99: #{_layer_forward.1} parent=1 // pred_check_branch
      %1745 = sbr.rel (0) target = $region101
    $region100: #{_layer_forward.1} parent=1 // pred_region
      %1747 = vsyncadd [#allocation8], 0
      %s1749 = sshll.u32 [#allocation14], 4
      %s1750 = int_to_ptr.vmem [resolvable:$true] %s1749
      %s1751 = sshll.u32 %s19, 4
      %s1752 = int_to_ptr.hbm [resolvable:$true] %s1751
      %1754 = dma.vmem_to_hbm [thread:$0]  %s1750, 128, %s1752, [#allocation8]
    $region101: #{_layer_forward.1} parent=1 // pred_fallthru
      _
    // Predicated region
    $region102: #{_layer_forward.1} parent=1 // pred_check
      _
    $region103: #{_layer_forward.1} parent=1 // pred_check_branch
      %1756 = sbr.rel (0) target = $region105
    $region104: #{_layer_forward.1} parent=1 // pred_region
      _
    $region105: #{_layer_forward.1} parent=1 // pred_fallthru
      _
    // Predicated region
    $region106: #{_layer_forward.1} parent=1 // pred_check
      _
    $region107: #{_layer_forward.1} parent=1 // pred_check_branch
      %1758 = sbr.rel (0) target = $region109
    $region108: #{_layer_forward.1} parent=1 // pred_region
      %1760 = dma.done [#allocation8], 128
    $region109: #{_layer_forward.1} parent=1 // pred_fallthru
      _
    // Predicated region
    $region110: #{_layer_forward.1} parent=1 // pred_check
      _
    $region111: #{_layer_forward.1} parent=1 // pred_check_branch
      %1762 = sbr.rel (0) target = $region113
    $region112: #{_layer_forward.1} parent=1 // pred_region
      _
    $region113: #{_layer_forward.1} parent=1 // pred_fallthru
      _
    %1763 = vsyncpa [#allocation7], 1
    %1764 = vsyncpa [#allocation10], 1
    %1765 = vsyncpa [#allocation13], 1
    %1766 = vsyncpa [#allocation8], 1

</llo_original>
